<compile_context>
chip_gen: v6e
topology: v6e:2x2x1
jax: 0.10.0
libtpu: 0.0.40
codegen_flags: <defaults>
</compile_context>

<pallas_src>
import functools

import jax
import jax.numpy as jnp
from jax.experimental import pallas as pl
from jax.experimental.pallas import tpu as pltpu

_LANE = 128


def _mlp_kernel(*refs, n_inputs, n_layers, d_out, compute_dtype):
    """refs = (in_0..in_{m-1}, w0_0..w0_{m-1}, b0, w1, b1, ..., out_ref).

    First-layer weight is split into one row-block per input (fused concat).
    Weights are (in, out) in compute_dtype; biases are (1, out) f32.
    Matmuls accumulate in f32; bias-add / ReLU stay in f32.
    """
    in_refs = refs[:n_inputs]
    w0_refs = refs[n_inputs:2 * n_inputs]
    b0_ref = refs[2 * n_inputs]
    rest = refs[2 * n_inputs + 1:-1]          # (w1, b1, w2, b2, ...)
    out_ref = refs[-1]

    # ---- layer 0: torch.cat fused into per-input partial matmuls ----
    x = jnp.dot(in_refs[0][...].astype(compute_dtype), w0_refs[0][...],
                preferred_element_type=jnp.float32)
    for r, wr in zip(in_refs[1:], w0_refs[1:]):
        x = x + jnp.dot(r[...].astype(compute_dtype), wr[...],
                        preferred_element_type=jnp.float32)
    x = x + b0_ref[...]                        # f32 bias add
    if n_layers > 1:
        x = jnp.maximum(x, 0.0)                # ReLU in f32

    # ---- remaining layers (last layer's columns are lane-padded to 128) ----
    for l in range(n_layers - 1):
        w = rest[2 * l][...]
        b = rest[2 * l + 1][...]
        x = jnp.dot(x.astype(compute_dtype), w,
                    preferred_element_type=jnp.float32) + b
        if l < n_layers - 2:                   # no ReLU after the last linear
            x = jnp.maximum(x, 0.0)

    # Narrow store: only the real d_out columns go back to HBM.
    out_ref[...] = x[:, :d_out].astype(out_ref.dtype)


def rendering_network_forward(points, normals, view_dirs, feature_vectors,
                              params, mode="idr", tm=512,
                              compute_dtype=jnp.bfloat16):
    """params: list of (W_eff^T with shape (in, out), bias with shape (1, out)), f32.

    Returns f32 (N, d_out), matching the PyTorch forward (at bf16 matmul
    precision when compute_dtype=bf16).
    """
    # TODO(synk): positional encoding of view_dirs (multires_view > 0) is not
    # implemented; the module default multires_view=0 passes view_dirs raw.
    if mode == "idr":
        inputs = [points, view_dirs, normals, feature_vectors]
    elif mode == "no_view_dir":
        inputs = [points, normals, feature_vectors]
    elif mode == "no_normal":
        inputs = [points, view_dirs, feature_vectors]
    else:
        raise ValueError(mode)

    widths = [a.shape[-1] for a in inputs]
    layers = [(w, b) for (w, b) in params]
    n_layers = len(layers)
    d_out = layers[-1][0].shape[1]

    # Lane-dense *compute* for the last layer: pad its columns to a multiple of
    # 128 (kernel slices back to d_out before the store -> narrow HBM output).
    d_out_pad = -(-d_out // _LANE) * _LANE
    w_last, b_last = layers[-1]
    layers[-1] = (jnp.pad(w_last, ((0, 0), (0, d_out_pad - d_out))),
                  jnp.pad(b_last, ((0, 0), (0, d_out_pad - d_out))))

    # ---- split first-layer weight per input (fuses the concat) ----
    w0, b0 = layers[0]
    assert w0.shape[0] == sum(widths), "first-layer fan_in must match inputs"
    w0_blocks, off = [], 0
    for w in widths:
        w0_blocks.append(w0[off:off + w, :].astype(compute_dtype))
        off += w
    b0_f32 = b0.astype(jnp.float32)

    flat_rest = []
    for l in range(1, n_layers):
        w, b = layers[l]
        flat_rest += [w.astype(compute_dtype), b.astype(jnp.float32)]

    # ---- pad rows to a multiple of tm; stream inputs at the caller's dtype ----
    N = inputs[0].shape[0]
    n_pad = (-N) % tm
    if n_pad:
        inputs = [jnp.pad(a, ((0, n_pad), (0, 0))) for a in inputs]
    n_rows = N + n_pad

    in_specs = [pl.BlockSpec((tm, w), lambda i: (i, 0)) for w in widths]
    # Weights/biases: full-array blocks with a constant index_map -> resident
    # in VMEM for the whole grid (no per-step re-DMA).
    in_specs += [pl.BlockSpec(a.shape, lambda i: (0, 0))
                 for a in (*w0_blocks, b0_f32, *flat_rest)]
    out_specs = pl.BlockSpec((tm, d_out), lambda i: (i, 0))

    kernel = functools.partial(_mlp_kernel, n_inputs=len(inputs),
                               n_layers=n_layers, d_out=d_out,
                               compute_dtype=compute_dtype)

    out = pl.pallas_call(
        kernel,
        out_shape=jax.ShapeDtypeStruct((n_rows, d_out), jnp.float32),
        grid_spec=pltpu.PrefetchScalarGridSpec(
            num_scalar_prefetch=0,
            grid=(n_rows // tm,),
            in_specs=in_specs,
            out_specs=out_specs,
        ),
        compiler_params=pltpu.CompilerParams(
            dimension_semantics=("parallel",)),
    )(*inputs, *w0_blocks, b0_f32, *flat_rest)

    return out[:N] if n_pad else out


def _ref_forward(points, normals, view_dirs, feature_vectors, params):
    """Pure-JAX f32 reference matching the PyTorch forward (mode='idr')."""
    x = jnp.concatenate([points, view_dirs, normals, feature_vectors], axis=-1)
    for l, (w, b) in enumerate(params):
        x = x @ w + b
        if l < len(params) - 1:
            x = jnp.maximum(x, 0.0)
    return x


def _init_params(key, dims):
    """Deterministic init mimicking nn.Linear + weight_norm at init time."""
    params = []
    for l in range(len(dims) - 1):
        fan_in, fan_out = dims[l], dims[l + 1]
        key, kv, kb = jax.random.split(key, 3)
        v = jax.random.normal(kv, (fan_out, fan_in), jnp.float32) * 0.1
        b = jax.random.normal(kb, (fan_out,), jnp.float32) * 0.01
        # weight_norm (dim=0): W[i,:] = g[i] * V[i,:] / ||V[i,:]||, g init = ||V[i,:]||
        row_norm = jnp.sqrt(jnp.sum(v * v, axis=1, keepdims=True))
        w_eff = row_norm * v / row_norm            # == v exactly at init
        params.append((w_eff.T, b.reshape(1, fan_out)))
    return params


if __name__ == "__main__":
    key = jax.random.PRNGKey(0)

    # d_in = 9 (points 3 + view_dirs 3 + normals 3), feature_vector_size = 32,
    # hidden dims = [64, 64], d_out = 3, mode = 'idr', multires_view = 0.
    N = 1024                        # tm=256 -> grid of 4 (>=2 for v7x megacore)
    feature_vector_size = 32
    d_in, d_out = 9, 3
    hidden = [64, 64]
    dims = [d_in + feature_vector_size] + hidden + [d_out]

    key, k0, k1, k2, k3 = jax.random.split(key, 5)
    # Inputs provided in bf16 at the HBM boundary (halves dominant read bytes).
    points = jax.random.normal(k0, (N, 3), jnp.float32).astype(jnp.bfloat16)
    normals = jax.random.normal(k1, (N, 3), jnp.float32).astype(jnp.bfloat16)
    view_dirs = jax.random.normal(k2, (N, 3), jnp.float32).astype(jnp.bfloat16)
    feature_vectors = jax.random.normal(
        k3, (N, feature_vector_size), jnp.float32).astype(jnp.bfloat16)

    params = _init_params(key, dims)

    out = rendering_network_forward(points, normals, view_dirs, feature_vectors,
                                    params, mode="idr", tm=256,
                                    compute_dtype=jnp.bfloat16)
    out = jax.block_until_ready(out)

    ref = _ref_forward(points.astype(jnp.float32), normals.astype(jnp.float32),
                       view_dirs.astype(jnp.float32),
                       feature_vectors.astype(jnp.float32), params)

    assert out.shape == (N, d_out)
    max_diff = float(jnp.max(jnp.abs(out - ref)))
    assert max_diff < 5e-2, (
        "mismatch vs JAX reference, max abs diff = %f" % max_diff)

    print("KERNEL_OK")
</pallas_src>

<mosaic_0001>
module attributes {stable_mosaic.version = 11 : i64} {
  func.func @_mlp_kernel(%arg0: i32, %arg1: memref<256x3xbf16, #tpu.memory_space<vmem>>, %arg2: memref<256x3xbf16, #tpu.memory_space<vmem>>, %arg3: memref<256x3xbf16, #tpu.memory_space<vmem>>, %arg4: memref<256x32xbf16, #tpu.memory_space<vmem>>, %arg5: memref<3x64xbf16, #tpu.memory_space<vmem>>, %arg6: memref<3x64xbf16, #tpu.memory_space<vmem>>, %arg7: memref<3x64xbf16, #tpu.memory_space<vmem>>, %arg8: memref<32x64xbf16, #tpu.memory_space<vmem>>, %arg9: memref<1x64xf32, #tpu.memory_space<vmem>>, %arg10: memref<64x64xbf16, #tpu.memory_space<vmem>>, %arg11: memref<1x64xf32, #tpu.memory_space<vmem>>, %arg12: memref<64x128xbf16, #tpu.memory_space<vmem>>, %arg13: memref<1x128xf32, #tpu.memory_space<vmem>>, %arg14: memref<256x3xf32, #tpu.memory_space<vmem>>) attributes {dimension_semantics = [#tpu.dimension_semantics<parallel>], iteration_bounds = array<i64: 4>, scalar_prefetch = 0 : i64, scratch_operands = 0 : i64, tpu.core_type = #tpu.core_type<tc>, window_params = [{transform_indices = @transform_0, window_bounds = array<i64: 256, 3>}, {transform_indices = @transform_1, window_bounds = array<i64: 256, 3>}, {transform_indices = @transform_2, window_bounds = array<i64: 256, 3>}, {transform_indices = @transform_3, window_bounds = array<i64: 256, 32>}, {pipeline_mode = #tpu.pipeline_mode<synchronous>, transform_indices = @transform_4, window_bounds = array<i64: 3, 64>}, {pipeline_mode = #tpu.pipeline_mode<synchronous>, transform_indices = @transform_5, window_bounds = array<i64: 3, 64>}, {pipeline_mode = #tpu.pipeline_mode<synchronous>, transform_indices = @transform_6, window_bounds = array<i64: 3, 64>}, {pipeline_mode = #tpu.pipeline_mode<synchronous>, transform_indices = @transform_7, window_bounds = array<i64: 32, 64>}, {pipeline_mode = #tpu.pipeline_mode<synchronous>, transform_indices = @transform_8, window_bounds = array<i64: 1, 64>}, {pipeline_mode = #tpu.pipeline_mode<synchronous>, transform_indices = @transform_9, window_bounds = array<i64: 64, 64>}, {pipeline_mode = #tpu.pipeline_mode<synchronous>, transform_indices = @transform_10, window_bounds = array<i64: 1, 64>}, {pipeline_mode = #tpu.pipeline_mode<synchronous>, transform_indices = @transform_11, window_bounds = array<i64: 64, 128>}, {pipeline_mode = #tpu.pipeline_mode<synchronous>, transform_indices = @transform_12, window_bounds = array<i64: 1, 128>}, {transform_indices = @transform_13, window_bounds = array<i64: 256, 3>}]} {
    %c0 = arith.constant 0 : index
    %c0_0 = arith.constant 0 : index
    %0 = vector.load %arg1[%c0, %c0_0] : memref<256x3xbf16, #tpu.memory_space<vmem>>, vector<256x3xbf16>
    %c0_1 = arith.constant 0 : index
    %c0_2 = arith.constant 0 : index
    %1 = vector.load %arg5[%c0_1, %c0_2] : memref<3x64xbf16, #tpu.memory_space<vmem>>, vector<3x64xbf16>
    %cst = arith.constant dense<0.000000e+00> : vector<256x64xf32>
    %2 = tpu.matmul %0, %1, %cst {dimension_numbers = #tpu.dot_dimension_numbers<[1], [0], [0], [1], [0, 0, 1, 1], [], []>} : vector<256x3xbf16>, vector<3x64xbf16>, vector<256x64xf32> -> vector<256x64xf32>
    %c0_3 = arith.constant 0 : index
    %c0_4 = arith.constant 0 : index
    %3 = vector.load %arg2[%c0_3, %c0_4] : memref<256x3xbf16, #tpu.memory_space<vmem>>, vector<256x3xbf16>
    %c0_5 = arith.constant 0 : index
    %c0_6 = arith.constant 0 : index
    %4 = vector.load %arg6[%c0_5, %c0_6] : memref<3x64xbf16, #tpu.memory_space<vmem>>, vector<3x64xbf16>
    %cst_7 = arith.constant dense<0.000000e+00> : vector<256x64xf32>
    %5 = tpu.matmul %3, %4, %cst_7 {dimension_numbers = #tpu.dot_dimension_numbers<[1], [0], [0], [1], [0, 0, 1, 1], [], []>} : vector<256x3xbf16>, vector<3x64xbf16>, vector<256x64xf32> -> vector<256x64xf32>
    %6 = arith.addf %2, %5 : vector<256x64xf32>
    %c0_8 = arith.constant 0 : index
    %c0_9 = arith.constant 0 : index
    %7 = vector.load %arg3[%c0_8, %c0_9] : memref<256x3xbf16, #tpu.memory_space<vmem>>, vector<256x3xbf16>
    %c0_10 = arith.constant 0 : index
    %c0_11 = arith.constant 0 : index
    %8 = vector.load %arg7[%c0_10, %c0_11] : memref<3x64xbf16, #tpu.memory_space<vmem>>, vector<3x64xbf16>
    %cst_12 = arith.constant dense<0.000000e+00> : vector<256x64xf32>
    %9 = tpu.matmul %7, %8, %cst_12 {dimension_numbers = #tpu.dot_dimension_numbers<[1], [0], [0], [1], [0, 0, 1, 1], [], []>} : vector<256x3xbf16>, vector<3x64xbf16>, vector<256x64xf32> -> vector<256x64xf32>
    %10 = arith.addf %6, %9 : vector<256x64xf32>
    %c0_13 = arith.constant 0 : index
    %c0_14 = arith.constant 0 : index
    %11 = vector.load %arg4[%c0_13, %c0_14] : memref<256x32xbf16, #tpu.memory_space<vmem>>, vector<256x32xbf16>
    %c0_15 = arith.constant 0 : index
    %c0_16 = arith.constant 0 : index
    %12 = vector.load %arg8[%c0_15, %c0_16] : memref<32x64xbf16, #tpu.memory_space<vmem>>, vector<32x64xbf16>
    %cst_17 = arith.constant dense<0.000000e+00> : vector<256x64xf32>
    %13 = tpu.matmul %11, %12, %cst_17 {dimension_numbers = #tpu.dot_dimension_numbers<[1], [0], [0], [1], [0, 0, 1, 1], [], []>} : vector<256x32xbf16>, vector<32x64xbf16>, vector<256x64xf32> -> vector<256x64xf32>
    %14 = arith.addf %10, %13 : vector<256x64xf32>
    %c0_18 = arith.constant 0 : index
    %c0_19 = arith.constant 0 : index
    %15 = vector.load %arg9[%c0_18, %c0_19] : memref<1x64xf32, #tpu.memory_space<vmem>>, vector<1x64xf32>
    %16 = vector.broadcast %15 : vector<1x64xf32> to vector<256x64xf32>
    %17 = arith.addf %14, %16 : vector<256x64xf32>
    %cst_20 = arith.constant 0.000000e+00 : f32
    %18 = vector.broadcast %cst_20 : f32 to vector<256x64xf32>
    %19 = arith.maximumf %17, %18 : vector<256x64xf32>
    %c0_21 = arith.constant 0 : index
    %c0_22 = arith.constant 0 : index
    %20 = vector.load %arg10[%c0_21, %c0_22] : memref<64x64xbf16, #tpu.memory_space<vmem>>, vector<64x64xbf16>
    %c0_23 = arith.constant 0 : index
    %c0_24 = arith.constant 0 : index
    %21 = vector.load %arg11[%c0_23, %c0_24] : memref<1x64xf32, #tpu.memory_space<vmem>>, vector<1x64xf32>
    %22 = arith.truncf %19 : vector<256x64xf32> to vector<256x64xbf16>
    %cst_25 = arith.constant dense<0.000000e+00> : vector<256x64xf32>
    %23 = tpu.matmul %22, %20, %cst_25 {dimension_numbers = #tpu.dot_dimension_numbers<[1], [0], [0], [1], [0, 0, 1, 1], [], []>} : vector<256x64xbf16>, vector<64x64xbf16>, vector<256x64xf32> -> vector<256x64xf32>
    %24 = vector.broadcast %21 : vector<1x64xf32> to vector<256x64xf32>
    %25 = arith.addf %23, %24 : vector<256x64xf32>
    %cst_26 = arith.constant 0.000000e+00 : f32
    %26 = vector.broadcast %cst_26 : f32 to vector<256x64xf32>
    %27 = arith.maximumf %25, %26 : vector<256x64xf32>
    %c0_27 = arith.constant 0 : index
    %c0_28 = arith.constant 0 : index
    %28 = vector.load %arg12[%c0_27, %c0_28] : memref<64x128xbf16, #tpu.memory_space<vmem>>, vector<64x128xbf16>
    %c0_29 = arith.constant 0 : index
    %c0_30 = arith.constant 0 : index
    %29 = vector.load %arg13[%c0_29, %c0_30] : memref<1x128xf32, #tpu.memory_space<vmem>>, vector<1x128xf32>
    %30 = arith.truncf %27 : vector<256x64xf32> to vector<256x64xbf16>
    %cst_31 = arith.constant dense<0.000000e+00> : vector<256x128xf32>
    %31 = tpu.matmul %30, %28, %cst_31 {dimension_numbers = #tpu.dot_dimension_numbers<[1], [0], [0], [1], [0, 0, 1, 1], [], []>} : vector<256x64xbf16>, vector<64x128xbf16>, vector<256x128xf32> -> vector<256x128xf32>
    %32 = vector.broadcast %29 : vector<1x128xf32> to vector<256x128xf32>
    %33 = arith.addf %31, %32 : vector<256x128xf32>
    %34 = vector.extract_strided_slice %33 {offsets = [0, 0], sizes = [256, 3], strides = [1, 1]} : vector<256x128xf32> to vector<256x3xf32>
    %c0_32 = arith.constant 0 : index
    %c0_33 = arith.constant 0 : index
    %35 = vector.load %arg14[%c0_32, %c0_33] : memref<256x3xf32, #tpu.memory_space<vmem>>, vector<256x3xf32>
    tpu.vector_store %arg14[%c0_32, %c0_33], %34 {strides = array<i32>} : memref<256x3xf32, #tpu.memory_space<vmem>>, vector<256x3xf32>,
    return
  }
  func.func @transform_0(%arg0: i32) -> (i32, i32) {
    %c0_i32 = arith.constant 0 : i32
    %c0_i32_0 = arith.constant 0 : i32
    return %arg0, %c0_i32 : i32, i32
  }
  func.func @transform_1(%arg0: i32) -> (i32, i32) {
    %c0_i32 = arith.constant 0 : i32
    %c0_i32_0 = arith.constant 0 : i32
    return %arg0, %c0_i32 : i32, i32
  }
  func.func @transform_2(%arg0: i32) -> (i32, i32) {
    %c0_i32 = arith.constant 0 : i32
    %c0_i32_0 = arith.constant 0 : i32
    return %arg0, %c0_i32 : i32, i32
  }
  func.func @transform_3(%arg0: i32) -> (i32, i32) {
    %c0_i32 = arith.constant 0 : i32
    %c0_i32_0 = arith.constant 0 : i32
    return %arg0, %c0_i32 : i32, i32
  }
  func.func @transform_4(%arg0: i32) -> (i32, i32) {
    %c0_i32 = arith.constant 0 : i32
    %c0_i32_0 = arith.constant 0 : i32
    %c0_i32_1 = arith.constant 0 : i32
    return %c0_i32, %c0_i32_0 : i32, i32
  }
  func.func @transform_5(%arg0: i32) -> (i32, i32) {
    %c0_i32 = arith.constant 0 : i32
    %c0_i32_0 = arith.constant 0 : i32
    %c0_i32_1 = arith.constant 0 : i32
    return %c0_i32, %c0_i32_0 : i32, i32
  }
  func.func @transform_6(%arg0: i32) -> (i32, i32) {
    %c0_i32 = arith.constant 0 : i32
    %c0_i32_0 = arith.constant 0 : i32
    %c0_i32_1 = arith.constant 0 : i32
    return %c0_i32, %c0_i32_0 : i32, i32
  }
  func.func @transform_7(%arg0: i32) -> (i32, i32) {
    %c0_i32 = arith.constant 0 : i32
    %c0_i32_0 = arith.constant 0 : i32
    %c0_i32_1 = arith.constant 0 : i32
    return %c0_i32, %c0_i32_0 : i32, i32
  }
  func.func @transform_8(%arg0: i32) -> (i32, i32) {
    %c0_i32 = arith.constant 0 : i32
    %c0_i32_0 = arith.constant 0 : i32
    %c0_i32_1 = arith.constant 0 : i32
    return %c0_i32, %c0_i32_0 : i32, i32
  }
  func.func @transform_9(%arg0: i32) -> (i32, i32) {
    %c0_i32 = arith.constant 0 : i32
    %c0_i32_0 = arith.constant 0 : i32
    %c0_i32_1 = arith.constant 0 : i32
    return %c0_i32, %c0_i32_0 : i32, i32
  }
  func.func @transform_10(%arg0: i32) -> (i32, i32) {
    %c0_i32 = arith.constant 0 : i32
    %c0_i32_0 = arith.constant 0 : i32
    %c0_i32_1 = arith.constant 0 : i32
    return %c0_i32, %c0_i32_0 : i32, i32
  }
  func.func @transform_11(%arg0: i32) -> (i32, i32) {
    %c0_i32 = arith.constant 0 : i32
    %c0_i32_0 = arith.constant 0 : i32
    %c0_i32_1 = arith.constant 0 : i32
    return %c0_i32, %c0_i32_0 : i32, i32
  }
  func.func @transform_12(%arg0: i32) -> (i32, i32) {
    %c0_i32 = arith.constant 0 : i32
    %c0_i32_0 = arith.constant 0 : i32
    %c0_i32_1 = arith.constant 0 : i32
    return %c0_i32, %c0_i32_0 : i32, i32
  }
  func.func @transform_13(%arg0: i32) -> (i32, i32) {
    %c0_i32 = arith.constant 0 : i32
    %c0_i32_0 = arith.constant 0 : i32
    return %arg0, %c0_i32 : i32, i32
  }
}

</mosaic_0001>

<llo_original>
// kernel: tpu_custom_call.1
$region0: #{tpu_custom_call.1}
  #allocation0 [shape = 'u32[]', space=smem, size = 0x4, offset = 0x4, fixed_abs, tag = 'smem constant byte address 0x4 - core index']
  #allocation1 [shape = 'u32[144,128]{1,0:T(1,128)}', space=vmem, size = 0x12000, scoped, tag = 'internal scratch']
  %s0 = inlined_call_operand.vmem [shape: bf16[1024,3], index: 0, kind: input, shape index: {}]
  %s1 = inlined_call_operand.vmem [shape: bf16[1024,3], index: 1, kind: input, shape index: {}]
  %s2 = inlined_call_operand.vmem [shape: bf16[1024,3], index: 2, kind: input, shape index: {}]
  %s3 = inlined_call_operand.vmem [shape: bf16[1024,32], index: 3, kind: input, shape index: {}]
  %s4 = inlined_call_operand.vmem [shape: bf16[3,64], index: 4, kind: input, shape index: {}]
  %s5 = inlined_call_operand.vmem [shape: bf16[3,64], index: 5, kind: input, shape index: {}]
  %s6 = inlined_call_operand.vmem [shape: bf16[3,64], index: 6, kind: input, shape index: {}]
  %s7 = inlined_call_operand.vmem [shape: bf16[32,64], index: 7, kind: input, shape index: {}]
  %s8 = inlined_call_operand.vmem [shape: f32[1,64], index: 8, kind: input, shape index: {}]
  %s9 = inlined_call_operand.vmem [shape: bf16[64,64], index: 9, kind: input, shape index: {}]
  %s10 = inlined_call_operand.vmem [shape: f32[1,64], index: 10, kind: input, shape index: {}]
  %s11 = inlined_call_operand.vmem [shape: bf16[64,128], index: 11, kind: input, shape index: {}]
  %s12 = inlined_call_operand.vmem [shape: f32[1,128], index: 12, kind: input, shape index: {}]
  %s13 = inlined_call_operand.vmem [shape: f32[1024,3], index: 13, kind: output, shape index: {}]
  %s14 = sld [smem:[#allocation0]]
  $region85: #{tpu_custom_call.1} parent=0
    _
  %s16 = ssub.s32 1, %s14
  %s17 = scalar_select 0, %s16, %s14
  loop: start=0, step=1, limit=6
  $region2: #{tpu_custom_call.1} parent=0 // loop_pre_header
    _
  $region3: #{tpu_custom_call.1} parent=0 // loop_header
    %s19 = sphi 0, %s23
    %p20 = scmp.ge.s32.totalorder %s19, 6
    %s29 = sphi 0, %s31
    %s32 = sphi 0, %s29
    %s33 = sphi 0, %s32
    %s49 = sphi 0, %s33
    %s55 = sphi 0, %s57
    %s58 = sphi 0, %s55
    %s59 = sphi 0, %s58
    %s75 = sphi 0, %s59
    %s81 = sphi 0, %s83
    %s84 = sphi 0, %s81
    %s85 = sphi 0, %s84
    %s101 = sphi 0, %s85
    %s107 = sphi 0, %s109
    %s110 = sphi 0, %s107
    %s111 = sphi 0, %s110
    %s127 = sphi 0, %s111
    %s131 = sphi 0, %s131
    %s133 = sphi 0, %s131
    %s134 = sphi 0, %s133
    %s148 = sphi 0, %s134
    %s152 = sphi 0, %s152
    %s154 = sphi 0, %s152
    %s155 = sphi 0, %s154
    %s169 = sphi 0, %s155
    %s173 = sphi 0, %s173
    %s175 = sphi 0, %s173
    %s176 = sphi 0, %s175
    %s190 = sphi 0, %s176
    %s194 = sphi 0, %s194
    %s196 = sphi 0, %s194
    %s197 = sphi 0, %s196
    %s211 = sphi 0, %s197
    %s215 = sphi 0, %s215
    %s217 = sphi 0, %s215
    %s218 = sphi 0, %s217
    %s232 = sphi 0, %s218
    %s236 = sphi 0, %s236
    %s238 = sphi 0, %s236
    %s239 = sphi 0, %s238
    %s253 = sphi 0, %s239
    %s257 = sphi 0, %s257
    %s259 = sphi 0, %s257
    %s260 = sphi 0, %s259
    %s274 = sphi 0, %s260
    %s278 = sphi 0, %s278
    %s280 = sphi 0, %s278
    %s281 = sphi 0, %s280
    %s295 = sphi 0, %s281
    %s299 = sphi 0, %s299
    %s301 = sphi 0, %s299
    %s302 = sphi 0, %s301
    %s316 = sphi 0, %s302
    %s322 = sphi 0, %s324
    %s325 = sphi 0, %s322
    %s326 = sphi 0, %s325
    %s342 = sphi 0, %s326
  $region4: #{tpu_custom_call.1} parent=0 // loop_header_branch
    %22 = sbr.rel (%p20) target = $region8
  $region5: #{tpu_custom_call.1} parent=0 // loop_body
    %s24 = ssub.s32 %s19, 1
    %s25 = ssub.s32 %s19, 2
    %s26 = sadd.s32 %s19, 1
    %s27 = ssub.s32 %s19, %s26
    %p28 = scmp.eq.s32.totalorder %s27, 0
    %s30 = sadd.s32 %s29, 1
    %s31 = scalar_select %p28, %s29, %s30
    %p34 = pneg %p28
    %p35 = scmp.eq.s32.totalorder %s19, 3
    %p36 = por %p34, %p35
    %p37 = scmp.ne.s32.totalorder %s29, %s32
    %p38 = scmp.eq.s32.totalorder %s19, 0
    %p39 = por %p37, %p38
    %p40 = scmp.ne.s32.totalorder %s29, %s32
    %p41 = scmp.eq.s32.totalorder %s24, 3
    %p42 = por %p40, %p41
    %p43 = scmp.ne.s32.totalorder %s32, %s33
    %p44 = scmp.eq.s32.totalorder %s24, 0
    %p45 = por %p43, %p44
    %p46 = scmp.ne.s32.totalorder %s32, %s33
    %p47 = scmp.eq.s32.totalorder %s25, 3
    %p48 = por %p46, %p47
    %p50 = scmp.ne.s32.totalorder %s33, %s49
    %p51 = scmp.eq.s32.totalorder %s25, 0
    %p52 = por %p50, %p51
    %s53 = ssub.s32 %s19, %s26
    %p54 = scmp.eq.s32.totalorder %s53, 0
    %s56 = sadd.s32 %s55, 1
    %s57 = scalar_select %p54, %s55, %s56
    %p60 = pneg %p54
    %p61 = scmp.eq.s32.totalorder %s19, 3
    %p62 = por %p60, %p61
    %p63 = scmp.ne.s32.totalorder %s55, %s58
    %p64 = scmp.eq.s32.totalorder %s19, 0
    %p65 = por %p63, %p64
    %p66 = scmp.ne.s32.totalorder %s55, %s58
    %p67 = scmp.eq.s32.totalorder %s24, 3
    %p68 = por %p66, %p67
    %p69 = scmp.ne.s32.totalorder %s58, %s59
    %p70 = scmp.eq.s32.totalorder %s24, 0
    %p71 = por %p69, %p70
    %p72 = scmp.ne.s32.totalorder %s58, %s59
    %p73 = scmp.eq.s32.totalorder %s25, 3
    %p74 = por %p72, %p73
    %p76 = scmp.ne.s32.totalorder %s59, %s75
    %p77 = scmp.eq.s32.totalorder %s25, 0
    %p78 = por %p76, %p77
    %s79 = ssub.s32 %s19, %s26
    %p80 = scmp.eq.s32.totalorder %s79, 0
    %s82 = sadd.s32 %s81, 1
    %s83 = scalar_select %p80, %s81, %s82
    %p86 = pneg %p80
    %p87 = scmp.eq.s32.totalorder %s19, 3
    %p88 = por %p86, %p87
    %p89 = scmp.ne.s32.totalorder %s81, %s84
    %p90 = scmp.eq.s32.totalorder %s19, 0
    %p91 = por %p89, %p90
    %p92 = scmp.ne.s32.totalorder %s81, %s84
    %p93 = scmp.eq.s32.totalorder %s24, 3
    %p94 = por %p92, %p93
    %p95 = scmp.ne.s32.totalorder %s84, %s85
    %p96 = scmp.eq.s32.totalorder %s24, 0
    %p97 = por %p95, %p96
    %p98 = scmp.ne.s32.totalorder %s84, %s85
    %p99 = scmp.eq.s32.totalorder %s25, 3
    %p100 = por %p98, %p99
    %p102 = scmp.ne.s32.totalorder %s85, %s101
    %p103 = scmp.eq.s32.totalorder %s25, 0
    %p104 = por %p102, %p103
    %s105 = ssub.s32 %s19, %s26
    %p106 = scmp.eq.s32.totalorder %s105, 0
    %s108 = sadd.s32 %s107, 1
    %s109 = scalar_select %p106, %s107, %s108
    %p112 = pneg %p106
    %p113 = scmp.eq.s32.totalorder %s19, 3
    %p114 = por %p112, %p113
    %p115 = scmp.ne.s32.totalorder %s107, %s110
    %p116 = scmp.eq.s32.totalorder %s19, 0
    %p117 = por %p115, %p116
    %p118 = scmp.ne.s32.totalorder %s107, %s110
    %p119 = scmp.eq.s32.totalorder %s24, 3
    %p120 = por %p118, %p119
    %p121 = scmp.ne.s32.totalorder %s110, %s111
    %p122 = scmp.eq.s32.totalorder %s24, 0
    %p123 = por %p121, %p122
    %p124 = scmp.ne.s32.totalorder %s110, %s111
    %p125 = scmp.eq.s32.totalorder %s25, 3
    %p126 = por %p124, %p125
    %p128 = scmp.ne.s32.totalorder %s111, %s127
    %p129 = scmp.eq.s32.totalorder %s25, 0
    %p130 = por %p128, %p129
    %s132 = sadd.s32 %s131, 1
    %p135 = scmp.eq.s32.totalorder %s19, 3
    %p136 = scmp.ne.s32.totalorder %s131, %s133
    %p137 = scmp.eq.s32.totalorder %s19, 0
    %p138 = por %p136, %p137
    %p139 = scmp.ne.s32.totalorder %s131, %s133
    %p140 = scmp.eq.s32.totalorder %s24, 3
    %p141 = por %p139, %p140
    %p142 = scmp.ne.s32.totalorder %s133, %s134
    %p143 = scmp.eq.s32.totalorder %s24, 0
    %p144 = por %p142, %p143
    %p145 = scmp.ne.s32.totalorder %s133, %s134
    %p146 = scmp.eq.s32.totalorder %s25, 3
    %p147 = por %p145, %p146
    %p149 = scmp.ne.s32.totalorder %s134, %s148
    %p150 = scmp.eq.s32.totalorder %s25, 0
    %p151 = por %p149, %p150
    %s153 = sadd.s32 %s152, 1
    %p156 = scmp.eq.s32.totalorder %s19, 3
    %p157 = scmp.ne.s32.totalorder %s152, %s154
    %p158 = scmp.eq.s32.totalorder %s19, 0
    %p159 = por %p157, %p158
    %p160 = scmp.ne.s32.totalorder %s152, %s154
    %p161 = scmp.eq.s32.totalorder %s24, 3
    %p162 = por %p160, %p161
    %p163 = scmp.ne.s32.totalorder %s154, %s155
    %p164 = scmp.eq.s32.totalorder %s24, 0
    %p165 = por %p163, %p164
    %p166 = scmp.ne.s32.totalorder %s154, %s155
    %p167 = scmp.eq.s32.totalorder %s25, 3
    %p168 = por %p166, %p167
    %p170 = scmp.ne.s32.totalorder %s155, %s169
    %p171 = scmp.eq.s32.totalorder %s25, 0
    %p172 = por %p170, %p171
    %s174 = sadd.s32 %s173, 1
    %p177 = scmp.eq.s32.totalorder %s19, 3
    %p178 = scmp.ne.s32.totalorder %s173, %s175
    %p179 = scmp.eq.s32.totalorder %s19, 0
    %p180 = por %p178, %p179
    %p181 = scmp.ne.s32.totalorder %s173, %s175
    %p182 = scmp.eq.s32.totalorder %s24, 3
    %p183 = por %p181, %p182
    %p184 = scmp.ne.s32.totalorder %s175, %s176
    %p185 = scmp.eq.s32.totalorder %s24, 0
    %p186 = por %p184, %p185
    %p187 = scmp.ne.s32.totalorder %s175, %s176
    %p188 = scmp.eq.s32.totalorder %s25, 3
    %p189 = por %p187, %p188
    %p191 = scmp.ne.s32.totalorder %s176, %s190
    %p192 = scmp.eq.s32.totalorder %s25, 0
    %p193 = por %p191, %p192
    %s195 = sadd.s32 %s194, 1
    %p198 = scmp.eq.s32.totalorder %s19, 3
    %p199 = scmp.ne.s32.totalorder %s194, %s196
    %p200 = scmp.eq.s32.totalorder %s19, 0
    %p201 = por %p199, %p200
    %p202 = scmp.ne.s32.totalorder %s194, %s196
    %p203 = scmp.eq.s32.totalorder %s24, 3
    %p204 = por %p202, %p203
    %p205 = scmp.ne.s32.totalorder %s196, %s197
    %p206 = scmp.eq.s32.totalorder %s24, 0
    %p207 = por %p205, %p206
    %p208 = scmp.ne.s32.totalorder %s196, %s197
    %p209 = scmp.eq.s32.totalorder %s25, 3
    %p210 = por %p208, %p209
    %p212 = scmp.ne.s32.totalorder %s197, %s211
    %p213 = scmp.eq.s32.totalorder %s25, 0
    %p214 = por %p212, %p213
    %s216 = sadd.s32 %s215, 1
    %p219 = scmp.eq.s32.totalorder %s19, 3
    %p220 = scmp.ne.s32.totalorder %s215, %s217
    %p221 = scmp.eq.s32.totalorder %s19, 0
    %p222 = por %p220, %p221
    %p223 = scmp.ne.s32.totalorder %s215, %s217
    %p224 = scmp.eq.s32.totalorder %s24, 3
    %p225 = por %p223, %p224
    %p226 = scmp.ne.s32.totalorder %s217, %s218
    %p227 = scmp.eq.s32.totalorder %s24, 0
    %p228 = por %p226, %p227
    %p229 = scmp.ne.s32.totalorder %s217, %s218
    %p230 = scmp.eq.s32.totalorder %s25, 3
    %p231 = por %p229, %p230
    %p233 = scmp.ne.s32.totalorder %s218, %s232
    %p234 = scmp.eq.s32.totalorder %s25, 0
    %p235 = por %p233, %p234
    %s237 = sadd.s32 %s236, 1
    %p240 = scmp.eq.s32.totalorder %s19, 3
    %p241 = scmp.ne.s32.totalorder %s236, %s238
    %p242 = scmp.eq.s32.totalorder %s19, 0
    %p243 = por %p241, %p242
    %p244 = scmp.ne.s32.totalorder %s236, %s238
    %p245 = scmp.eq.s32.totalorder %s24, 3
    %p246 = por %p244, %p245
    %p247 = scmp.ne.s32.totalorder %s238, %s239
    %p248 = scmp.eq.s32.totalorder %s24, 0
    %p249 = por %p247, %p248
    %p250 = scmp.ne.s32.totalorder %s238, %s239
    %p251 = scmp.eq.s32.totalorder %s25, 3
    %p252 = por %p250, %p251
    %p254 = scmp.ne.s32.totalorder %s239, %s253
    %p255 = scmp.eq.s32.totalorder %s25, 0
    %p256 = por %p254, %p255
    %s258 = sadd.s32 %s257, 1
    %p261 = scmp.eq.s32.totalorder %s19, 3
    %p262 = scmp.ne.s32.totalorder %s257, %s259
    %p263 = scmp.eq.s32.totalorder %s19, 0
    %p264 = por %p262, %p263
    %p265 = scmp.ne.s32.totalorder %s257, %s259
    %p266 = scmp.eq.s32.totalorder %s24, 3
    %p267 = por %p265, %p266
    %p268 = scmp.ne.s32.totalorder %s259, %s260
    %p269 = scmp.eq.s32.totalorder %s24, 0
    %p270 = por %p268, %p269
    %p271 = scmp.ne.s32.totalorder %s259, %s260
    %p272 = scmp.eq.s32.totalorder %s25, 3
    %p273 = por %p271, %p272
    %p275 = scmp.ne.s32.totalorder %s260, %s274
    %p276 = scmp.eq.s32.totalorder %s25, 0
    %p277 = por %p275, %p276
    %s279 = sadd.s32 %s278, 1
    %p282 = scmp.eq.s32.totalorder %s19, 3
    %p283 = scmp.ne.s32.totalorder %s278, %s280
    %p284 = scmp.eq.s32.totalorder %s19, 0
    %p285 = por %p283, %p284
    %p286 = scmp.ne.s32.totalorder %s278, %s280
    %p287 = scmp.eq.s32.totalorder %s24, 3
    %p288 = por %p286, %p287
    %p289 = scmp.ne.s32.totalorder %s280, %s281
    %p290 = scmp.eq.s32.totalorder %s24, 0
    %p291 = por %p289, %p290
    %p292 = scmp.ne.s32.totalorder %s280, %s281
    %p293 = scmp.eq.s32.totalorder %s25, 3
    %p294 = por %p292, %p293
    %p296 = scmp.ne.s32.totalorder %s281, %s295
    %p297 = scmp.eq.s32.totalorder %s25, 0
    %p298 = por %p296, %p297
    %s300 = sadd.s32 %s299, 1
    %p303 = scmp.eq.s32.totalorder %s19, 3
    %p304 = scmp.ne.s32.totalorder %s299, %s301
    %p305 = scmp.eq.s32.totalorder %s19, 0
    %p306 = por %p304, %p305
    %p307 = scmp.ne.s32.totalorder %s299, %s301
    %p308 = scmp.eq.s32.totalorder %s24, 3
    %p309 = por %p307, %p308
    %p310 = scmp.ne.s32.totalorder %s301, %s302
    %p311 = scmp.eq.s32.totalorder %s24, 0
    %p312 = por %p310, %p311
    %p313 = scmp.ne.s32.totalorder %s301, %s302
    %p314 = scmp.eq.s32.totalorder %s25, 3
    %p315 = por %p313, %p314
    %p317 = scmp.ne.s32.totalorder %s302, %s316
    %p318 = scmp.eq.s32.totalorder %s25, 0
    %p319 = por %p317, %p318
    %s320 = ssub.s32 %s19, %s26
    %p321 = scmp.eq.s32.totalorder %s320, 0
    %s323 = sadd.s32 %s322, 1
    %s324 = scalar_select %p321, %s322, %s323
    %p327 = pneg %p321
    %p328 = scmp.eq.s32.totalorder %s19, 3
    %p329 = por %p327, %p328
    %p330 = scmp.ne.s32.totalorder %s322, %s325
    %p331 = scmp.eq.s32.totalorder %s19, 0
    %p332 = por %p330, %p331
    %p333 = scmp.ne.s32.totalorder %s322, %s325
    %p334 = scmp.eq.s32.totalorder %s24, 3
    %p335 = por %p333, %p334
    %p336 = scmp.ne.s32.totalorder %s325, %s326
    %p337 = scmp.eq.s32.totalorder %s24, 0
    %p338 = por %p336, %p337
    %p339 = scmp.ne.s32.totalorder %s325, %s326
    %p340 = scmp.eq.s32.totalorder %s25, 3
    %p341 = por %p339, %p340
    %p343 = scmp.ne.s32.totalorder %s326, %s342
    %p344 = scmp.eq.s32.totalorder %s25, 0
    %p345 = por %p343, %p344
    %p346 = scmp.le.s32.totalorder 1, %s19
    %p347 = scmp.lt.s32.totalorder %s19, 5
    %p348 = pnand %p346, %p347
    %p349 = pneg %p348
    // Predicated region
    $region9: #{tpu_custom_call.1} parent=5 // pred_check
      _
    $region10: #{tpu_custom_call.1} parent=5 // pred_check_branch
      %351 = sbr.rel (%p348) target = $region12
    $region11: #{tpu_custom_call.1} parent=5 // pred_region
      %s352 = ssub.s32 %s19, 1
      // Predicated region
      $region13: #{tpu_custom_call.1} parent=11 // pred_check
        %p353 = pneg %p144
      $region14: #{tpu_custom_call.1} parent=11 // pred_check_branch
        %355 = sbr.rel (%p353) target = $region16
      $region15: #{tpu_custom_call.1} parent=11 // pred_region
        _
      $region16: #{tpu_custom_call.1} parent=11 // pred_fallthru
        _
      // Predicated region
      $region17: #{tpu_custom_call.1} parent=11 // pred_check
        %p356 = pneg %p165
      $region18: #{tpu_custom_call.1} parent=11 // pred_check_branch
        %358 = sbr.rel (%p356) target = $region20
      $region19: #{tpu_custom_call.1} parent=11 // pred_region
        _
      $region20: #{tpu_custom_call.1} parent=11 // pred_fallthru
        _
      // Predicated region
      $region21: #{tpu_custom_call.1} parent=11 // pred_check
        %p359 = pneg %p186
      $region22: #{tpu_custom_call.1} parent=11 // pred_check_branch
        %361 = sbr.rel (%p359) target = $region24
      $region23: #{tpu_custom_call.1} parent=11 // pred_region
        _
      $region24: #{tpu_custom_call.1} parent=11 // pred_fallthru
        _
      // Predicated region
      $region25: #{tpu_custom_call.1} parent=11 // pred_check
        %p362 = pneg %p207
      $region26: #{tpu_custom_call.1} parent=11 // pred_check_branch
        %364 = sbr.rel (%p362) target = $region28
      $region27: #{tpu_custom_call.1} parent=11 // pred_region
        _
      $region28: #{tpu_custom_call.1} parent=11 // pred_fallthru
        _
      // Predicated region
      $region29: #{tpu_custom_call.1} parent=11 // pred_check
        %p365 = pneg %p228
      $region30: #{tpu_custom_call.1} parent=11 // pred_check_branch
        %367 = sbr.rel (%p365) target = $region32
      $region31: #{tpu_custom_call.1} parent=11 // pred_region
        _
      $region32: #{tpu_custom_call.1} parent=11 // pred_fallthru
        _
      // Predicated region
      $region33: #{tpu_custom_call.1} parent=11 // pred_check
        %p368 = pneg %p249
      $region34: #{tpu_custom_call.1} parent=11 // pred_check_branch
        %370 = sbr.rel (%p368) target = $region36
      $region35: #{tpu_custom_call.1} parent=11 // pred_region
        _
      $region36: #{tpu_custom_call.1} parent=11 // pred_fallthru
        _
      // Predicated region
      $region37: #{tpu_custom_call.1} parent=11 // pred_check
        %p371 = pneg %p270
      $region38: #{tpu_custom_call.1} parent=11 // pred_check_branch
        %373 = sbr.rel (%p371) target = $region40
      $region39: #{tpu_custom_call.1} parent=11 // pred_region
        _
      $region40: #{tpu_custom_call.1} parent=11 // pred_fallthru
        _
      // Predicated region
      $region41: #{tpu_custom_call.1} parent=11 // pred_check
        %p374 = pneg %p291
      $region42: #{tpu_custom_call.1} parent=11 // pred_check_branch
        %376 = sbr.rel (%p374) target = $region44
      $region43: #{tpu_custom_call.1} parent=11 // pred_region
        _
      $region44: #{tpu_custom_call.1} parent=11 // pred_fallthru
        _
      // Predicated region
      $region45: #{tpu_custom_call.1} parent=11 // pred_check
        %p377 = pneg %p312
      $region46: #{tpu_custom_call.1} parent=11 // pred_check_branch
        %379 = sbr.rel (%p377) target = $region48
      $region47: #{tpu_custom_call.1} parent=11 // pred_region
        _
      $region48: #{tpu_custom_call.1} parent=11 // pred_fallthru
        _
    $region12: #{tpu_custom_call.1} parent=5 // pred_fallthru
      _
    %p380 = scmp.lt.s32.totalorder %s19, 4
    // Predicated region
    $region49: #{tpu_custom_call.1} parent=5 // pred_check
      %p381 = pneg %p380
    $region50: #{tpu_custom_call.1} parent=5 // pred_check_branch
      %383 = sbr.rel (%p381) target = $region52
    $region51: #{tpu_custom_call.1} parent=5 // pred_region
      // Predicated region
      $region53: #{tpu_custom_call.1} parent=51 // pred_check
        %p384 = pneg %p39
      $region54: #{tpu_custom_call.1} parent=51 // pred_check_branch
        %386 = sbr.rel (%p384) target = $region56
      $region55: #{tpu_custom_call.1} parent=51 // pred_region
        %s387 = smul.u32 32, %s19
        %p388 = scmp.lt.s32.totalorder %s387, 127
        %s389 = scalar_select %p388, %s387, 127
        %s390 = smul.addr %s389, 4
        %s391 = scalar_lea.vmem %s0, %s390
        %s392 = smul.u32 32, %s19
      $region56: #{tpu_custom_call.1} parent=51 // pred_fallthru
        _
      // Predicated region
      $region57: #{tpu_custom_call.1} parent=51 // pred_check
        %p393 = pneg %p65
      $region58: #{tpu_custom_call.1} parent=51 // pred_check_branch
        %395 = sbr.rel (%p393) target = $region60
      $region59: #{tpu_custom_call.1} parent=51 // pred_region
        %s396 = smul.u32 32, %s19
        %p397 = scmp.lt.s32.totalorder %s396, 127
        %s398 = scalar_select %p397, %s396, 127
        %s399 = smul.addr %s398, 4
        %s400 = scalar_lea.vmem %s1, %s399
        %s401 = smul.u32 32, %s19
      $region60: #{tpu_custom_call.1} parent=51 // pred_fallthru
        _
      // Predicated region
      $region61: #{tpu_custom_call.1} parent=51 // pred_check
        %p402 = pneg %p91
      $region62: #{tpu_custom_call.1} parent=51 // pred_check_branch
        %404 = sbr.rel (%p402) target = $region64
      $region63: #{tpu_custom_call.1} parent=51 // pred_region
        %s405 = smul.u32 32, %s19
        %p406 = scmp.lt.s32.totalorder %s405, 127
        %s407 = scalar_select %p406, %s405, 127
        %s408 = smul.addr %s407, 4
        %s409 = scalar_lea.vmem %s2, %s408
        %s410 = smul.u32 32, %s19
      $region64: #{tpu_custom_call.1} parent=51 // pred_fallthru
        _
      // Predicated region
      $region65: #{tpu_custom_call.1} parent=51 // pred_check
        %p411 = pneg %p117
      $region66: #{tpu_custom_call.1} parent=51 // pred_check_branch
        %413 = sbr.rel (%p411) target = $region68
      $region67: #{tpu_custom_call.1} parent=51 // pred_region
        %s414 = smul.u32 32, %s19
        %p415 = scmp.lt.s32.totalorder %s414, 127
        %s416 = scalar_select %p415, %s414, 127
        %s417 = smul.addr %s416, 4
        %s418 = scalar_lea.vmem %s3, %s417
        %s419 = smul.u32 32, %s19
      $region68: #{tpu_custom_call.1} parent=51 // pred_fallthru
        _
    $region52: #{tpu_custom_call.1} parent=5 // pred_fallthru
      _
    %p420 = scmp.le.s32.totalorder 1, %s19
    %p421 = scmp.lt.s32.totalorder %s19, 5
    %p422 = pnand %p420, %p421
    %p423 = pneg %p422
    // Predicated region
    $region69: #{tpu_custom_call.1} parent=5 // pred_check
      _
    $region70: #{tpu_custom_call.1} parent=5 // pred_check_branch
      %425 = sbr.rel (%p422) target = $region72
    $region71: #{tpu_custom_call.1} parent=5 // pred_region
      %s426 = ssub.s32 %s19, 1
      %s427 = smul.u32 32, %s24
      %p428 = scmp.lt.s32.totalorder %s427, 127
      %s429 = scalar_select %p428, %s427, 127
      %s430 = smul.addr %s429, 4
      %s431 = scalar_lea.vmem %s0, %s430
      %p432 = pneg %p45
      %p433 = pneg %p42
      %s434 = smul.u32 32, %s24
      %p435 = scmp.lt.s32.totalorder %s434, 127
      %s436 = scalar_select %p435, %s434, 127
      %s437 = smul.addr %s436, 4
      %s438 = scalar_lea.vmem %s1, %s437
      %p439 = pneg %p71
      %p440 = pneg %p68
      %s441 = smul.u32 32, %s24
      %p442 = scmp.lt.s32.totalorder %s441, 127
      %s443 = scalar_select %p442, %s441, 127
      %s444 = smul.addr %s443, 4
      %s445 = scalar_lea.vmem %s2, %s444
      %p446 = pneg %p97
      %p447 = pneg %p94
      %s448 = smul.u32 32, %s24
      %p449 = scmp.lt.s32.totalorder %s448, 127
      %s450 = scalar_select %p449, %s448, 127
      %s451 = smul.addr %s450, 4
      %s452 = scalar_lea.vmem %s3, %s451
      %p453 = pneg %p123
      %p454 = pneg %p120
      %p455 = pneg %p144
      %p456 = pneg %p141
      %p457 = pneg %p165
      %p458 = pneg %p162
      %p459 = pneg %p186
      %p460 = pneg %p183
      %p461 = pneg %p207
      %p462 = pneg %p204
      %p463 = pneg %p228
      %p464 = pneg %p225
      %p465 = pneg %p249
      %p466 = pneg %p246
      %p467 = pneg %p270
      %p468 = pneg %p267
      %p469 = pneg %p291
      %p470 = pneg %p288
      %p471 = pneg %p312
      %p472 = pneg %p309
      %p473 = pneg %p338
      %p474 = pneg %p335
      %s475 = smul.u32 32, %s24
      %p476 = scmp.lt.s32.totalorder %s475, 127
      %s477 = scalar_select %p476, %s475, 127
      %s478 = smul.addr %s477, 8
      %s479 = scalar_lea.vmem %s13, %s478
      %s480 = smul.u32 32, %s24
      %p481 = scmp.lt.s32.totalorder %s480, 127
      %s482 = scalar_select %p481, %s480, 127
      %s483 = smul.addr %s482, 4
      %s484 = scalar_lea.vmem %s0, %s483
      %s485 = smul.u32 32, %s24
      %s486 = smul.u32 32, %s24
      %p487 = scmp.lt.s32.totalorder %s486, 127
      %s488 = scalar_select %p487, %s486, 127
      %s489 = smul.addr %s488, 4
      %s490 = scalar_lea.vmem %s1, %s489
      %s491 = smul.u32 32, %s24
      %s492 = smul.u32 32, %s24
      %p493 = scmp.lt.s32.totalorder %s492, 127
      %s494 = scalar_select %p493, %s492, 127
      %s495 = smul.addr %s494, 4
      %s496 = scalar_lea.vmem %s2, %s495
      %s497 = smul.u32 32, %s24
      %s498 = smul.u32 32, %s24
      %p499 = scmp.lt.s32.totalorder %s498, 127
      %s500 = scalar_select %p499, %s498, 127
      %s501 = smul.addr %s500, 4
      %s502 = scalar_lea.vmem %s3, %s501
      %s503 = smul.u32 32, %s24
      %s504 = smul.u32 32, %s24
      %p505 = scmp.lt.s32.totalorder %s504, 127
      %s506 = scalar_select %p505, %s504, 127
      %s507 = smul.addr %s506, 8
      %s508 = scalar_lea.vmem %s13, %s507
      %s509 = smul.u32 32, %s24
      %v511 = vld [vmem:[%s484] sm:$0xf]
      %v512 = vld [vmem:[%s484 + $0x4] sm:$0xf]
      %v513 = vld [vmem:[%s484 + $0x8] sm:$0xf]
      %v514 = vld [vmem:[%s484 + $0xc] sm:$0xf]
      %v515 = vld [vmem:[%s484 + $0x10] sm:$0xf]
      %v516 = vld [vmem:[%s484 + $0x14] sm:$0xf]
      %v517 = vld [vmem:[%s484 + $0x18] sm:$0xf]
      %v518 = vld [vmem:[%s484 + $0x1c] sm:$0xf]
      %v519 = vld [vmem:[%s484 + $0x20] sm:$0xf]
      %v520 = vld [vmem:[%s484 + $0x24] sm:$0xf]
      %v521 = vld [vmem:[%s484 + $0x28] sm:$0xf]
      %v522 = vld [vmem:[%s484 + $0x2c] sm:$0xf]
      %v523 = vld [vmem:[%s484 + $0x30] sm:$0xf]
      %v524 = vld [vmem:[%s484 + $0x34] sm:$0xf]
      %v525 = vld [vmem:[%s484 + $0x38] sm:$0xf]
      %v526 = vld [vmem:[%s484 + $0x3c] sm:$0xf]
      %v527 = vld [vmem:[%s484 + $0x40] sm:$0xf]
      %v528 = vld [vmem:[%s484 + $0x44] sm:$0xf]
      %v529 = vld [vmem:[%s484 + $0x48] sm:$0xf]
      %v530 = vld [vmem:[%s484 + $0x4c] sm:$0xf]
      %v531 = vld [vmem:[%s484 + $0x50] sm:$0xf]
      %v532 = vld [vmem:[%s484 + $0x54] sm:$0xf]
      %v533 = vld [vmem:[%s484 + $0x58] sm:$0xf]
      %v534 = vld [vmem:[%s484 + $0x5c] sm:$0xf]
      %v535 = vld [vmem:[%s484 + $0x60] sm:$0xf]
      %v536 = vld [vmem:[%s484 + $0x64] sm:$0xf]
      %v537 = vld [vmem:[%s484 + $0x68] sm:$0xf]
      %v538 = vld [vmem:[%s484 + $0x6c] sm:$0xf]
      %v539 = vld [vmem:[%s484 + $0x70] sm:$0xf]
      %v540 = vld [vmem:[%s484 + $0x74] sm:$0xf]
      %v541 = vld [vmem:[%s484 + $0x78] sm:$0xf]
      %v542 = vld [vmem:[%s484 + $0x7c] sm:$0xf]
      %v543 = vld [vmem:[%s4] sm:$0x3]
      %v544 = vld [vmem:[%s490] sm:$0xf]
      %v545 = vld [vmem:[%s490 + $0x4] sm:$0xf]
      %v546 = vld [vmem:[%s490 + $0x8] sm:$0xf]
      %v547 = vld [vmem:[%s490 + $0xc] sm:$0xf]
      %v548 = vld [vmem:[%s490 + $0x10] sm:$0xf]
      %v549 = vld [vmem:[%s490 + $0x14] sm:$0xf]
      %v550 = vld [vmem:[%s490 + $0x18] sm:$0xf]
      %v551 = vld [vmem:[%s490 + $0x1c] sm:$0xf]
      %v552 = vld [vmem:[%s490 + $0x20] sm:$0xf]
      %v553 = vld [vmem:[%s490 + $0x24] sm:$0xf]
      %v554 = vld [vmem:[%s490 + $0x28] sm:$0xf]
      %v555 = vld [vmem:[%s490 + $0x2c] sm:$0xf]
      %v556 = vld [vmem:[%s490 + $0x30] sm:$0xf]
      %v557 = vld [vmem:[%s490 + $0x34] sm:$0xf]
      %v558 = vld [vmem:[%s490 + $0x38] sm:$0xf]
      %v559 = vld [vmem:[%s490 + $0x3c] sm:$0xf]
      %v560 = vld [vmem:[%s490 + $0x40] sm:$0xf]
      %v561 = vld [vmem:[%s490 + $0x44] sm:$0xf]
      %v562 = vld [vmem:[%s490 + $0x48] sm:$0xf]
      %v563 = vld [vmem:[%s490 + $0x4c] sm:$0xf]
      %v564 = vld [vmem:[%s490 + $0x50] sm:$0xf]
      %v565 = vld [vmem:[%s490 + $0x54] sm:$0xf]
      %v566 = vld [vmem:[%s490 + $0x58] sm:$0xf]
      %v567 = vld [vmem:[%s490 + $0x5c] sm:$0xf]
      %v568 = vld [vmem:[%s490 + $0x60] sm:$0xf]
      %v569 = vld [vmem:[%s490 + $0x64] sm:$0xf]
      %v570 = vld [vmem:[%s490 + $0x68] sm:$0xf]
      %v571 = vld [vmem:[%s490 + $0x6c] sm:$0xf]
      %v572 = vld [vmem:[%s490 + $0x70] sm:$0xf]
      %v573 = vld [vmem:[%s490 + $0x74] sm:$0xf]
      %v574 = vld [vmem:[%s490 + $0x78] sm:$0xf]
      %v575 = vld [vmem:[%s490 + $0x7c] sm:$0xf]
      %v576 = vld [vmem:[%s5] sm:$0x3]
      %v609 = vunpack.c.l.b16 %v544
      %v610 = vunpack.c.l.b16 %v545
      %v611 = vunpack.c.l.b16 %v546
      %v612 = vunpack.c.l.b16 %v547
      %v613 = vunpack.c.l.b16 %v548
      %v614 = vunpack.c.l.b16 %v549
      %v615 = vunpack.c.l.b16 %v550
      %v616 = vunpack.c.l.b16 %v551
      %v617 = vunpack.c.l.b16 %v552
      %v618 = vunpack.c.l.b16 %v553
      %v619 = vunpack.c.l.b16 %v554
      %v620 = vunpack.c.l.b16 %v555
      %v621 = vunpack.c.l.b16 %v556
      %v622 = vunpack.c.l.b16 %v557
      %v623 = vunpack.c.l.b16 %v558
      %v624 = vunpack.c.l.b16 %v559
      %v625 = vunpack.c.l.b16 %v560
      %v626 = vunpack.c.l.b16 %v561
      %v627 = vunpack.c.l.b16 %v562
      %v628 = vunpack.c.l.b16 %v563
      %v629 = vunpack.c.l.b16 %v564
      %v630 = vunpack.c.l.b16 %v565
      %v631 = vunpack.c.l.b16 %v566
      %v632 = vunpack.c.l.b16 %v567
      %v633 = vunpack.c.l.b16 %v568
      %v634 = vunpack.c.l.b16 %v569
      %v635 = vunpack.c.l.b16 %v570
      %v636 = vunpack.c.l.b16 %v571
      %v637 = vunpack.c.l.b16 %v572
      %v638 = vunpack.c.l.b16 %v573
      %v639 = vunpack.c.l.b16 %v574
      %v640 = vunpack.c.l.b16 %v575
      %v641 = vpack.c.b16 %v610, %v609
      %v642 = vpack.c.b16 %v612, %v611
      %v643 = vpack.c.b16 %v614, %v613
      %v644 = vpack.c.b16 %v616, %v615
      %v645 = vpack.c.b16 %v618, %v617
      %v646 = vpack.c.b16 %v620, %v619
      %v647 = vpack.c.b16 %v622, %v621
      %v648 = vpack.c.b16 %v624, %v623
      %v649 = vpack.c.b16 %v626, %v625
      %v650 = vpack.c.b16 %v628, %v627
      %v651 = vpack.c.b16 %v630, %v629
      %v652 = vpack.c.b16 %v632, %v631
      %v653 = vpack.c.b16 %v634, %v633
      %v654 = vpack.c.b16 %v636, %v635
      %v655 = vpack.c.b16 %v638, %v637
      %v656 = vpack.c.b16 %v640, %v639
      %vm657 = vcmask 23552
      %v659 = vsel %vm657, %v641, 0
      %v662 = vsel %vm657, %v642, 0
      %v665 = vsel %vm657, %v643, 0
      %v668 = vsel %vm657, %v644, 0
      %v671 = vsel %vm657, %v645, 0
      %v674 = vsel %vm657, %v646, 0
      %v677 = vsel %vm657, %v647, 0
      %v680 = vsel %vm657, %v648, 0
      %v683 = vsel %vm657, %v649, 0
      %v686 = vsel %vm657, %v650, 0
      %v689 = vsel %vm657, %v651, 0
      %v692 = vsel %vm657, %v652, 0
      %v695 = vsel %vm657, %v653, 0
      %v698 = vsel %vm657, %v654, 0
      %v701 = vsel %vm657, %v655, 0
      %v704 = vsel %vm657, %v656, 0
      %vm706 = vcmask 1040384
      %vm707 = vcmask 1041408
      %v708 = vsel %vm706, 4294967295, 65535
      %v709 = vsel %vm707, %v708, 0
      %v711 = vand.u32 %v576, %v709
      %713 = vmatprep.subr.bf16.mxu0 0
      %714 = vmatpush1.bf16.msra.mxu0 0
      %715 = vmatprep.subr.bf16.mxu0 0
      %716 = vmatpush1.bf16.msra.mxu0 0
      %717 = vmatprep.subr.bf16.mxu0 0
      %718 = vmatpush1.bf16.msra.mxu0 0
      %719 = vmatprep.subr.bf16.mxu0 0
      %720 = vmatpush1.bf16.msra.mxu0 0
      %721 = vmatprep.subr.bf16.mxu0 0
      %722 = vmatpush1.bf16.msra.mxu0 0
      %723 = vmatprep.subr.bf16.mxu0 0
      %724 = vmatpush1.bf16.msra.mxu0 0
      %725 = vmatprep.subr.bf16.mxu0 0
      %726 = vmatpush1.bf16.msra.mxu0 0
      %727 = vmatprep.subr.bf16.mxu0 0
      %728 = vmatpush1.bf16.msra.mxu0 %v711
      %729 = vmatprep.subr.bf16.mxu0 0
      %730 = vmatpush2.bf16.msra.mxu0 0
      %731 = vmatprep.subr.bf16.mxu0 0
      %732 = vmatpush2.bf16.msra.mxu0 0
      %733 = vmatprep.subr.bf16.mxu0 0
      %734 = vmatpush2.bf16.msra.mxu0 0
      %735 = vmatprep.subr.bf16.mxu0 0
      %736 = vmatpush2.bf16.msra.mxu0 0
      %737 = vmatprep.subr.bf16.mxu0 0
      %738 = vmatpush2.bf16.msra.mxu0 0
      %739 = vmatprep.subr.bf16.mxu0 0
      %740 = vmatpush2.bf16.msra.mxu0 0
      %741 = vmatprep.subr.bf16.mxu0 0
      %742 = vmatpush2.bf16.msra.mxu0 0
      %743 = vmatprep.subr.bf16.mxu0 0
      %744 = vmatpush2.bf16.msra.mxu0 0
      %745 = vmatprep.mubr.bf16.mxu0 0
      %746 = vmatmul.mubr.bf16.gmra.mxu0 %v659
      %v747 = vpop.f32.mrf.mxu0
      %v748 = vadd.f32 0.0, %v747
      %v749 = vpop.f32.mrf.mxu0
      %v750 = vpop.f32.mrf.mxu0
      %v751 = vadd.f32 0.0, %v750
      %v752 = vpop.f32.mrf.mxu0
      %753 = vmatprep.mubr.bf16.mxu0 0
      %754 = vmatmul.mubr.bf16.gmra.mxu0 %v662
      %v755 = vpop.f32.mrf.mxu0
      %v756 = vadd.f32 0.0, %v755
      %v757 = vpop.f32.mrf.mxu0
      %v758 = vpop.f32.mrf.mxu0
      %v759 = vadd.f32 0.0, %v758
      %v760 = vpop.f32.mrf.mxu0
      %761 = vmatprep.mubr.bf16.mxu0 0
      %762 = vmatmul.mubr.bf16.gmra.mxu0 %v665
      %v763 = vpop.f32.mrf.mxu0
      %v764 = vadd.f32 0.0, %v763
      %v765 = vpop.f32.mrf.mxu0
      %v766 = vpop.f32.mrf.mxu0
      %v767 = vadd.f32 0.0, %v766
      %v768 = vpop.f32.mrf.mxu0
      %769 = vmatprep.mubr.bf16.mxu0 0
      %770 = vmatmul.mubr.bf16.gmra.mxu0 %v668
      %v771 = vpop.f32.mrf.mxu0
      %v772 = vadd.f32 0.0, %v771
      %v773 = vpop.f32.mrf.mxu0
      %v774 = vpop.f32.mrf.mxu0
      %v775 = vadd.f32 0.0, %v774
      %v776 = vpop.f32.mrf.mxu0
      %777 = vmatprep.mubr.bf16.mxu0 0
      %778 = vmatmul.mubr.bf16.gmra.mxu0 %v671
      %v779 = vpop.f32.mrf.mxu0
      %v780 = vadd.f32 0.0, %v779
      %v781 = vpop.f32.mrf.mxu0
      %v782 = vpop.f32.mrf.mxu0
      %v783 = vadd.f32 0.0, %v782
      %v784 = vpop.f32.mrf.mxu0
      %785 = vmatprep.mubr.bf16.mxu0 0
      %786 = vmatmul.mubr.bf16.gmra.mxu0 %v674
      %v787 = vpop.f32.mrf.mxu0
      %v788 = vadd.f32 0.0, %v787
      %v789 = vpop.f32.mrf.mxu0
      %v790 = vpop.f32.mrf.mxu0
      %v791 = vadd.f32 0.0, %v790
      %v792 = vpop.f32.mrf.mxu0
      %793 = vmatprep.mubr.bf16.mxu0 0
      %794 = vmatmul.mubr.bf16.gmra.mxu0 %v677
      %v795 = vpop.f32.mrf.mxu0
      %v796 = vadd.f32 0.0, %v795
      %v797 = vpop.f32.mrf.mxu0
      %v798 = vpop.f32.mrf.mxu0
      %v799 = vadd.f32 0.0, %v798
      %v800 = vpop.f32.mrf.mxu0
      %801 = vmatprep.mubr.bf16.mxu0 0
      %802 = vmatmul.mubr.bf16.gmra.mxu0 %v680
      %v803 = vpop.f32.mrf.mxu0
      %v804 = vadd.f32 0.0, %v803
      %v805 = vpop.f32.mrf.mxu0
      %v806 = vpop.f32.mrf.mxu0
      %v807 = vadd.f32 0.0, %v806
      %v808 = vpop.f32.mrf.mxu0
      %809 = vmatprep.mubr.bf16.mxu0 0
      %810 = vmatmul.mubr.bf16.gmra.mxu0 %v683
      %v811 = vpop.f32.mrf.mxu0
      %v812 = vadd.f32 0.0, %v811
      %v813 = vpop.f32.mrf.mxu0
      %v814 = vpop.f32.mrf.mxu0
      %v815 = vadd.f32 0.0, %v814
      %v816 = vpop.f32.mrf.mxu0
      %817 = vmatprep.mubr.bf16.mxu0 0
      %818 = vmatmul.mubr.bf16.gmra.mxu0 %v686
      %v819 = vpop.f32.mrf.mxu0
      %v820 = vadd.f32 0.0, %v819
      %v821 = vpop.f32.mrf.mxu0
      %v822 = vpop.f32.mrf.mxu0
      %v823 = vadd.f32 0.0, %v822
      %v824 = vpop.f32.mrf.mxu0
      %825 = vmatprep.mubr.bf16.mxu0 0
      %826 = vmatmul.mubr.bf16.gmra.mxu0 %v689
      %v827 = vpop.f32.mrf.mxu0
      %v828 = vadd.f32 0.0, %v827
      %v829 = vpop.f32.mrf.mxu0
      %v830 = vpop.f32.mrf.mxu0
      %v831 = vadd.f32 0.0, %v830
      %v832 = vpop.f32.mrf.mxu0
      %833 = vmatprep.mubr.bf16.mxu0 0
      %834 = vmatmul.mubr.bf16.gmra.mxu0 %v692
      %v835 = vpop.f32.mrf.mxu0
      %v836 = vadd.f32 0.0, %v835
      %v837 = vpop.f32.mrf.mxu0
      %v838 = vpop.f32.mrf.mxu0
      %v839 = vadd.f32 0.0, %v838
      %v840 = vpop.f32.mrf.mxu0
      %841 = vmatprep.mubr.bf16.mxu0 0
      %842 = vmatmul.mubr.bf16.gmra.mxu0 %v695
      %v843 = vpop.f32.mrf.mxu0
      %v844 = vadd.f32 0.0, %v843
      %v845 = vpop.f32.mrf.mxu0
      %v846 = vpop.f32.mrf.mxu0
      %v847 = vadd.f32 0.0, %v846
      %v848 = vpop.f32.mrf.mxu0
      %849 = vmatprep.mubr.bf16.mxu0 0
      %850 = vmatmul.mubr.bf16.gmra.mxu0 %v698
      %v851 = vpop.f32.mrf.mxu0
      %v852 = vadd.f32 0.0, %v851
      %v853 = vpop.f32.mrf.mxu0
      %v854 = vpop.f32.mrf.mxu0
      %v855 = vadd.f32 0.0, %v854
      %v856 = vpop.f32.mrf.mxu0
      %857 = vmatprep.mubr.bf16.mxu0 0
      %858 = vmatmul.mubr.bf16.gmra.mxu0 %v701
      %v859 = vpop.f32.mrf.mxu0
      %v860 = vadd.f32 0.0, %v859
      %v861 = vpop.f32.mrf.mxu0
      %v862 = vpop.f32.mrf.mxu0
      %v863 = vadd.f32 0.0, %v862
      %v864 = vpop.f32.mrf.mxu0
      %865 = vmatprep.mubr.bf16.mxu0 0
      %866 = vmatmul.mubr.bf16.gmra.mxu0 %v704
      %v867 = vpop.f32.mrf.mxu0
      %v868 = vadd.f32 0.0, %v867
      %v869 = vpop.f32.mrf.mxu0
      %v870 = vpop.f32.mrf.mxu0
      %v871 = vadd.f32 0.0, %v870
      %v872 = vpop.f32.mrf.mxu0
      %873 = vdwg.mxu0
      %v906 = vunpack.c.l.b16 %v511
      %v907 = vunpack.c.l.b16 %v512
      %v908 = vunpack.c.l.b16 %v513
      %v909 = vunpack.c.l.b16 %v514
      %v910 = vunpack.c.l.b16 %v515
      %v911 = vunpack.c.l.b16 %v516
      %v912 = vunpack.c.l.b16 %v517
      %v913 = vunpack.c.l.b16 %v518
      %v914 = vunpack.c.l.b16 %v519
      %v915 = vunpack.c.l.b16 %v520
      %v916 = vunpack.c.l.b16 %v521
      %v917 = vunpack.c.l.b16 %v522
      %v918 = vunpack.c.l.b16 %v523
      %v919 = vunpack.c.l.b16 %v524
      %v920 = vunpack.c.l.b16 %v525
      %v921 = vunpack.c.l.b16 %v526
      %v922 = vunpack.c.l.b16 %v527
      %v923 = vunpack.c.l.b16 %v528
      %v924 = vunpack.c.l.b16 %v529
      %v925 = vunpack.c.l.b16 %v530
      %v926 = vunpack.c.l.b16 %v531
      %v927 = vunpack.c.l.b16 %v532
      %v928 = vunpack.c.l.b16 %v533
      %v929 = vunpack.c.l.b16 %v534
      %v930 = vunpack.c.l.b16 %v535
      %v931 = vunpack.c.l.b16 %v536
      %v932 = vunpack.c.l.b16 %v537
      %v933 = vunpack.c.l.b16 %v538
      %v934 = vunpack.c.l.b16 %v539
      %v935 = vunpack.c.l.b16 %v540
      %v936 = vunpack.c.l.b16 %v541
      %v937 = vunpack.c.l.b16 %v542
      %v938 = vpack.c.b16 %v907, %v906
      %v939 = vpack.c.b16 %v909, %v908
      %v940 = vpack.c.b16 %v911, %v910
      %v941 = vpack.c.b16 %v913, %v912
      %v942 = vpack.c.b16 %v915, %v914
      %v943 = vpack.c.b16 %v917, %v916
      %v944 = vpack.c.b16 %v919, %v918
      %v945 = vpack.c.b16 %v921, %v920
      %v946 = vpack.c.b16 %v923, %v922
      %v947 = vpack.c.b16 %v925, %v924
      %v948 = vpack.c.b16 %v927, %v926
      %v949 = vpack.c.b16 %v929, %v928
      %v950 = vpack.c.b16 %v931, %v930
      %v951 = vpack.c.b16 %v933, %v932
      %v952 = vpack.c.b16 %v935, %v934
      %v953 = vpack.c.b16 %v937, %v936
      %v955 = vsel %vm657, %v938, 0
      %v958 = vsel %vm657, %v939, 0
      %v961 = vsel %vm657, %v940, 0
      %v964 = vsel %vm657, %v941, 0
      %v967 = vsel %vm657, %v942, 0
      %v970 = vsel %vm657, %v943, 0
      %v973 = vsel %vm657, %v944, 0
      %v976 = vsel %vm657, %v945, 0
      %v979 = vsel %vm657, %v946, 0
      %v982 = vsel %vm657, %v947, 0
      %v985 = vsel %vm657, %v948, 0
      %v988 = vsel %vm657, %v949, 0
      %v991 = vsel %vm657, %v950, 0
      %v994 = vsel %vm657, %v951, 0
      %v997 = vsel %vm657, %v952, 0
      %v1000 = vsel %vm657, %v953, 0
      %v1003 = vand.u32 %v543, %v709
      %1005 = vmatprep.subr.bf16.mxu0 0
      %1006 = vmatpush1.bf16.msra.mxu0 0
      %1007 = vmatprep.subr.bf16.mxu0 0
      %1008 = vmatpush1.bf16.msra.mxu0 0
      %1009 = vmatprep.subr.bf16.mxu0 0
      %1010 = vmatpush1.bf16.msra.mxu0 0
      %1011 = vmatprep.subr.bf16.mxu0 0
      %1012 = vmatpush1.bf16.msra.mxu0 0
      %1013 = vmatprep.subr.bf16.mxu0 0
      %1014 = vmatpush1.bf16.msra.mxu0 0
      %1015 = vmatprep.subr.bf16.mxu0 0
      %1016 = vmatpush1.bf16.msra.mxu0 0
      %1017 = vmatprep.subr.bf16.mxu0 0
      %1018 = vmatpush1.bf16.msra.mxu0 0
      %1019 = vmatprep.subr.bf16.mxu0 0
      %1020 = vmatpush1.bf16.msra.mxu0 %v1003
      %1021 = vmatprep.subr.bf16.mxu0 0
      %1022 = vmatpush2.bf16.msra.mxu0 0
      %1023 = vmatprep.subr.bf16.mxu0 0
      %1024 = vmatpush2.bf16.msra.mxu0 0
      %1025 = vmatprep.subr.bf16.mxu0 0
      %1026 = vmatpush2.bf16.msra.mxu0 0
      %1027 = vmatprep.subr.bf16.mxu0 0
      %1028 = vmatpush2.bf16.msra.mxu0 0
      %1029 = vmatprep.subr.bf16.mxu0 0
      %1030 = vmatpush2.bf16.msra.mxu0 0
      %1031 = vmatprep.subr.bf16.mxu0 0
      %1032 = vmatpush2.bf16.msra.mxu0 0
      %1033 = vmatprep.subr.bf16.mxu0 0
      %1034 = vmatpush2.bf16.msra.mxu0 0
      %1035 = vmatprep.subr.bf16.mxu0 0
      %1036 = vmatpush2.bf16.msra.mxu0 0
      %1037 = vmatprep.mubr.bf16.mxu0 0
      %1038 = vmatmul.mubr.bf16.gmra.mxu0 %v955
      %v1039 = vpop.f32.mrf.mxu0
      %v1040 = vadd.f32 %v748, %v1039
      %v1041 = vpop.f32.mrf.mxu0
      %v1042 = vpop.f32.mrf.mxu0
      %v1043 = vadd.f32 %v751, %v1042
      %v1044 = vpop.f32.mrf.mxu0
      %1045 = vmatprep.mubr.bf16.mxu0 0
      %1046 = vmatmul.mubr.bf16.gmra.mxu0 %v958
      %v1047 = vpop.f32.mrf.mxu0
      %v1048 = vadd.f32 %v756, %v1047
      %v1049 = vpop.f32.mrf.mxu0
      %v1050 = vpop.f32.mrf.mxu0
      %v1051 = vadd.f32 %v759, %v1050
      %v1052 = vpop.f32.mrf.mxu0
      %1053 = vmatprep.mubr.bf16.mxu0 0
      %1054 = vmatmul.mubr.bf16.gmra.mxu0 %v961
      %v1055 = vpop.f32.mrf.mxu0
      %v1056 = vadd.f32 %v764, %v1055
      %v1057 = vpop.f32.mrf.mxu0
      %v1058 = vpop.f32.mrf.mxu0
      %v1059 = vadd.f32 %v767, %v1058
      %v1060 = vpop.f32.mrf.mxu0
      %1061 = vmatprep.mubr.bf16.mxu0 0
      %1062 = vmatmul.mubr.bf16.gmra.mxu0 %v964
      %v1063 = vpop.f32.mrf.mxu0
      %v1064 = vadd.f32 %v772, %v1063
      %v1065 = vpop.f32.mrf.mxu0
      %v1066 = vpop.f32.mrf.mxu0
      %v1067 = vadd.f32 %v775, %v1066
      %v1068 = vpop.f32.mrf.mxu0
      %1069 = vmatprep.mubr.bf16.mxu0 0
      %1070 = vmatmul.mubr.bf16.gmra.mxu0 %v967
      %v1071 = vpop.f32.mrf.mxu0
      %v1072 = vadd.f32 %v780, %v1071
      %v1073 = vpop.f32.mrf.mxu0
      %v1074 = vpop.f32.mrf.mxu0
      %v1075 = vadd.f32 %v783, %v1074
      %v1076 = vpop.f32.mrf.mxu0
      %1077 = vmatprep.mubr.bf16.mxu0 0
      %1078 = vmatmul.mubr.bf16.gmra.mxu0 %v970
      %v1079 = vpop.f32.mrf.mxu0
      %v1080 = vadd.f32 %v788, %v1079
      %v1081 = vpop.f32.mrf.mxu0
      %v1082 = vpop.f32.mrf.mxu0
      %v1083 = vadd.f32 %v791, %v1082
      %v1084 = vpop.f32.mrf.mxu0
      %1085 = vmatprep.mubr.bf16.mxu0 0
      %1086 = vmatmul.mubr.bf16.gmra.mxu0 %v973
      %v1087 = vpop.f32.mrf.mxu0
      %v1088 = vadd.f32 %v796, %v1087
      %v1089 = vpop.f32.mrf.mxu0
      %v1090 = vpop.f32.mrf.mxu0
      %v1091 = vadd.f32 %v799, %v1090
      %v1092 = vpop.f32.mrf.mxu0
      %1093 = vmatprep.mubr.bf16.mxu0 0
      %1094 = vmatmul.mubr.bf16.gmra.mxu0 %v976
      %v1095 = vpop.f32.mrf.mxu0
      %v1096 = vadd.f32 %v804, %v1095
      %v1097 = vpop.f32.mrf.mxu0
      %v1098 = vpop.f32.mrf.mxu0
      %v1099 = vadd.f32 %v807, %v1098
      %v1100 = vpop.f32.mrf.mxu0
      %1101 = vmatprep.mubr.bf16.mxu0 0
      %1102 = vmatmul.mubr.bf16.gmra.mxu0 %v979
      %v1103 = vpop.f32.mrf.mxu0
      %v1104 = vadd.f32 %v812, %v1103
      %v1105 = vpop.f32.mrf.mxu0
      %v1106 = vpop.f32.mrf.mxu0
      %v1107 = vadd.f32 %v815, %v1106
      %v1108 = vpop.f32.mrf.mxu0
      %1109 = vmatprep.mubr.bf16.mxu0 0
      %1110 = vmatmul.mubr.bf16.gmra.mxu0 %v982
      %v1111 = vpop.f32.mrf.mxu0
      %v1112 = vadd.f32 %v820, %v1111
      %v1113 = vpop.f32.mrf.mxu0
      %v1114 = vpop.f32.mrf.mxu0
      %v1115 = vadd.f32 %v823, %v1114
      %v1116 = vpop.f32.mrf.mxu0
      %1117 = vmatprep.mubr.bf16.mxu0 0
      %1118 = vmatmul.mubr.bf16.gmra.mxu0 %v985
      %v1119 = vpop.f32.mrf.mxu0
      %v1120 = vadd.f32 %v828, %v1119
      %v1121 = vpop.f32.mrf.mxu0
      %v1122 = vpop.f32.mrf.mxu0
      %v1123 = vadd.f32 %v831, %v1122
      %v1124 = vpop.f32.mrf.mxu0
      %1125 = vmatprep.mubr.bf16.mxu0 0
      %1126 = vmatmul.mubr.bf16.gmra.mxu0 %v988
      %v1127 = vpop.f32.mrf.mxu0
      %v1128 = vadd.f32 %v836, %v1127
      %v1129 = vpop.f32.mrf.mxu0
      %v1130 = vpop.f32.mrf.mxu0
      %v1131 = vadd.f32 %v839, %v1130
      %v1132 = vpop.f32.mrf.mxu0
      %1133 = vmatprep.mubr.bf16.mxu0 0
      %1134 = vmatmul.mubr.bf16.gmra.mxu0 %v991
      %v1135 = vpop.f32.mrf.mxu0
      %v1136 = vadd.f32 %v844, %v1135
      %v1137 = vpop.f32.mrf.mxu0
      %v1138 = vpop.f32.mrf.mxu0
      %v1139 = vadd.f32 %v847, %v1138
      %v1140 = vpop.f32.mrf.mxu0
      %1141 = vmatprep.mubr.bf16.mxu0 0
      %1142 = vmatmul.mubr.bf16.gmra.mxu0 %v994
      %v1143 = vpop.f32.mrf.mxu0
      %v1144 = vadd.f32 %v852, %v1143
      %v1145 = vpop.f32.mrf.mxu0
      %v1146 = vpop.f32.mrf.mxu0
      %v1147 = vadd.f32 %v855, %v1146
      %v1148 = vpop.f32.mrf.mxu0
      %1149 = vmatprep.mubr.bf16.mxu0 0
      %1150 = vmatmul.mubr.bf16.gmra.mxu0 %v997
      %v1151 = vpop.f32.mrf.mxu0
      %v1152 = vadd.f32 %v860, %v1151
      %v1153 = vpop.f32.mrf.mxu0
      %v1154 = vpop.f32.mrf.mxu0
      %v1155 = vadd.f32 %v863, %v1154
      %v1156 = vpop.f32.mrf.mxu0
      %1157 = vmatprep.mubr.bf16.mxu0 0
      %1158 = vmatmul.mubr.bf16.gmra.mxu0 %v1000
      %v1159 = vpop.f32.mrf.mxu0
      %v1160 = vadd.f32 %v868, %v1159
      %v1161 = vpop.f32.mrf.mxu0
      %v1162 = vpop.f32.mrf.mxu0
      %v1163 = vadd.f32 %v871, %v1162
      %v1164 = vpop.f32.mrf.mxu0
      %1165 = vdwg.mxu0
      %v1166 = vld [vmem:[%s496] sm:$0xf]
      %v1167 = vld [vmem:[%s496 + $0x4] sm:$0xf]
      %v1168 = vld [vmem:[%s496 + $0x8] sm:$0xf]
      %v1169 = vld [vmem:[%s496 + $0xc] sm:$0xf]
      %v1170 = vld [vmem:[%s496 + $0x10] sm:$0xf]
      %v1171 = vld [vmem:[%s496 + $0x14] sm:$0xf]
      %v1172 = vld [vmem:[%s496 + $0x18] sm:$0xf]
      %v1173 = vld [vmem:[%s496 + $0x1c] sm:$0xf]
      %v1174 = vld [vmem:[%s496 + $0x20] sm:$0xf]
      %v1175 = vld [vmem:[%s496 + $0x24] sm:$0xf]
      %v1176 = vld [vmem:[%s496 + $0x28] sm:$0xf]
      %v1177 = vld [vmem:[%s496 + $0x2c] sm:$0xf]
      %v1178 = vld [vmem:[%s496 + $0x30] sm:$0xf]
      %v1179 = vld [vmem:[%s496 + $0x34] sm:$0xf]
      %v1180 = vld [vmem:[%s496 + $0x38] sm:$0xf]
      %v1181 = vld [vmem:[%s496 + $0x3c] sm:$0xf]
      %v1182 = vld [vmem:[%s496 + $0x40] sm:$0xf]
      %v1183 = vld [vmem:[%s496 + $0x44] sm:$0xf]
      %v1184 = vld [vmem:[%s496 + $0x48] sm:$0xf]
      %v1185 = vld [vmem:[%s496 + $0x4c] sm:$0xf]
      %v1186 = vld [vmem:[%s496 + $0x50] sm:$0xf]
      %v1187 = vld [vmem:[%s496 + $0x54] sm:$0xf]
      %v1188 = vld [vmem:[%s496 + $0x58] sm:$0xf]
      %v1189 = vld [vmem:[%s496 + $0x5c] sm:$0xf]
      %v1190 = vld [vmem:[%s496 + $0x60] sm:$0xf]
      %v1191 = vld [vmem:[%s496 + $0x64] sm:$0xf]
      %v1192 = vld [vmem:[%s496 + $0x68] sm:$0xf]
      %v1193 = vld [vmem:[%s496 + $0x6c] sm:$0xf]
      %v1194 = vld [vmem:[%s496 + $0x70] sm:$0xf]
      %v1195 = vld [vmem:[%s496 + $0x74] sm:$0xf]
      %v1196 = vld [vmem:[%s496 + $0x78] sm:$0xf]
      %v1197 = vld [vmem:[%s496 + $0x7c] sm:$0xf]
      %v1198 = vld [vmem:[%s6] sm:$0x3]
      %v1231 = vunpack.c.l.b16 %v1166
      %v1232 = vunpack.c.l.b16 %v1167
      %v1233 = vunpack.c.l.b16 %v1168
      %v1234 = vunpack.c.l.b16 %v1169
      %v1235 = vunpack.c.l.b16 %v1170
      %v1236 = vunpack.c.l.b16 %v1171
      %v1237 = vunpack.c.l.b16 %v1172
      %v1238 = vunpack.c.l.b16 %v1173
      %v1239 = vunpack.c.l.b16 %v1174
      %v1240 = vunpack.c.l.b16 %v1175
      %v1241 = vunpack.c.l.b16 %v1176
      %v1242 = vunpack.c.l.b16 %v1177
      %v1243 = vunpack.c.l.b16 %v1178
      %v1244 = vunpack.c.l.b16 %v1179
      %v1245 = vunpack.c.l.b16 %v1180
      %v1246 = vunpack.c.l.b16 %v1181
      %v1247 = vunpack.c.l.b16 %v1182
      %v1248 = vunpack.c.l.b16 %v1183
      %v1249 = vunpack.c.l.b16 %v1184
      %v1250 = vunpack.c.l.b16 %v1185
      %v1251 = vunpack.c.l.b16 %v1186
      %v1252 = vunpack.c.l.b16 %v1187
      %v1253 = vunpack.c.l.b16 %v1188
      %v1254 = vunpack.c.l.b16 %v1189
      %v1255 = vunpack.c.l.b16 %v1190
      %v1256 = vunpack.c.l.b16 %v1191
      %v1257 = vunpack.c.l.b16 %v1192
      %v1258 = vunpack.c.l.b16 %v1193
      %v1259 = vunpack.c.l.b16 %v1194
      %v1260 = vunpack.c.l.b16 %v1195
      %v1261 = vunpack.c.l.b16 %v1196
      %v1262 = vunpack.c.l.b16 %v1197
      %v1263 = vpack.c.b16 %v1232, %v1231
      %v1264 = vpack.c.b16 %v1234, %v1233
      %v1265 = vpack.c.b16 %v1236, %v1235
      %v1266 = vpack.c.b16 %v1238, %v1237
      %v1267 = vpack.c.b16 %v1240, %v1239
      %v1268 = vpack.c.b16 %v1242, %v1241
      %v1269 = vpack.c.b16 %v1244, %v1243
      %v1270 = vpack.c.b16 %v1246, %v1245
      %v1271 = vpack.c.b16 %v1248, %v1247
      %v1272 = vpack.c.b16 %v1250, %v1249
      %v1273 = vpack.c.b16 %v1252, %v1251
      %v1274 = vpack.c.b16 %v1254, %v1253
      %v1275 = vpack.c.b16 %v1256, %v1255
      %v1276 = vpack.c.b16 %v1258, %v1257
      %v1277 = vpack.c.b16 %v1260, %v1259
      %v1278 = vpack.c.b16 %v1262, %v1261
      %v1280 = vsel %vm657, %v1263, 0
      %v1283 = vsel %vm657, %v1264, 0
      %v1286 = vsel %vm657, %v1265, 0
      %v1289 = vsel %vm657, %v1266, 0
      %v1292 = vsel %vm657, %v1267, 0
      %v1295 = vsel %vm657, %v1268, 0
      %v1298 = vsel %vm657, %v1269, 0
      %v1301 = vsel %vm657, %v1270, 0
      %v1304 = vsel %vm657, %v1271, 0
      %v1307 = vsel %vm657, %v1272, 0
      %v1310 = vsel %vm657, %v1273, 0
      %v1313 = vsel %vm657, %v1274, 0
      %v1316 = vsel %vm657, %v1275, 0
      %v1319 = vsel %vm657, %v1276, 0
      %v1322 = vsel %vm657, %v1277, 0
      %v1325 = vsel %vm657, %v1278, 0
      %v1328 = vand.u32 %v1198, %v709
      %1330 = vmatprep.subr.bf16.mxu0 0
      %1331 = vmatpush1.bf16.msra.mxu0 0
      %1332 = vmatprep.subr.bf16.mxu0 0
      %1333 = vmatpush1.bf16.msra.mxu0 0
      %1334 = vmatprep.subr.bf16.mxu0 0
      %1335 = vmatpush1.bf16.msra.mxu0 0
      %1336 = vmatprep.subr.bf16.mxu0 0
      %1337 = vmatpush1.bf16.msra.mxu0 0
      %1338 = vmatprep.subr.bf16.mxu0 0
      %1339 = vmatpush1.bf16.msra.mxu0 0
      %1340 = vmatprep.subr.bf16.mxu0 0
      %1341 = vmatpush1.bf16.msra.mxu0 0
      %1342 = vmatprep.subr.bf16.mxu0 0
      %1343 = vmatpush1.bf16.msra.mxu0 0
      %1344 = vmatprep.subr.bf16.mxu0 0
      %1345 = vmatpush1.bf16.msra.mxu0 %v1328
      %1346 = vmatprep.subr.bf16.mxu0 0
      %1347 = vmatpush2.bf16.msra.mxu0 0
      %1348 = vmatprep.subr.bf16.mxu0 0
      %1349 = vmatpush2.bf16.msra.mxu0 0
      %1350 = vmatprep.subr.bf16.mxu0 0
      %1351 = vmatpush2.bf16.msra.mxu0 0
      %1352 = vmatprep.subr.bf16.mxu0 0
      %1353 = vmatpush2.bf16.msra.mxu0 0
      %1354 = vmatprep.subr.bf16.mxu0 0
      %1355 = vmatpush2.bf16.msra.mxu0 0
      %1356 = vmatprep.subr.bf16.mxu0 0
      %1357 = vmatpush2.bf16.msra.mxu0 0
      %1358 = vmatprep.subr.bf16.mxu0 0
      %1359 = vmatpush2.bf16.msra.mxu0 0
      %1360 = vmatprep.subr.bf16.mxu0 0
      %1361 = vmatpush2.bf16.msra.mxu0 0
      %1362 = vmatprep.mubr.bf16.mxu0 0
      %1363 = vmatmul.mubr.bf16.gmra.mxu0 %v1280
      %v1364 = vpop.f32.mrf.mxu0
      %v1365 = vadd.f32 0.0, %v1364
      %v1366 = vpop.f32.mrf.mxu0
      %v1367 = vpop.f32.mrf.mxu0
      %v1368 = vadd.f32 0.0, %v1367
      %v1369 = vpop.f32.mrf.mxu0
      %1370 = vmatprep.mubr.bf16.mxu0 0
      %1371 = vmatmul.mubr.bf16.gmra.mxu0 %v1283
      %v1372 = vpop.f32.mrf.mxu0
      %v1373 = vadd.f32 0.0, %v1372
      %v1374 = vpop.f32.mrf.mxu0
      %v1375 = vpop.f32.mrf.mxu0
      %v1376 = vadd.f32 0.0, %v1375
      %v1377 = vpop.f32.mrf.mxu0
      %1378 = vmatprep.mubr.bf16.mxu0 0
      %1379 = vmatmul.mubr.bf16.gmra.mxu0 %v1286
      %v1380 = vpop.f32.mrf.mxu0
      %v1381 = vadd.f32 0.0, %v1380
      %v1382 = vpop.f32.mrf.mxu0
      %v1383 = vpop.f32.mrf.mxu0
      %v1384 = vadd.f32 0.0, %v1383
      %v1385 = vpop.f32.mrf.mxu0
      %1386 = vmatprep.mubr.bf16.mxu0 0
      %1387 = vmatmul.mubr.bf16.gmra.mxu0 %v1289
      %v1388 = vpop.f32.mrf.mxu0
      %v1389 = vadd.f32 0.0, %v1388
      %v1390 = vpop.f32.mrf.mxu0
      %v1391 = vpop.f32.mrf.mxu0
      %v1392 = vadd.f32 0.0, %v1391
      %v1393 = vpop.f32.mrf.mxu0
      %1394 = vmatprep.mubr.bf16.mxu0 0
      %1395 = vmatmul.mubr.bf16.gmra.mxu0 %v1292
      %v1396 = vpop.f32.mrf.mxu0
      %v1397 = vadd.f32 0.0, %v1396
      %v1398 = vpop.f32.mrf.mxu0
      %v1399 = vpop.f32.mrf.mxu0
      %v1400 = vadd.f32 0.0, %v1399
      %v1401 = vpop.f32.mrf.mxu0
      %1402 = vmatprep.mubr.bf16.mxu0 0
      %1403 = vmatmul.mubr.bf16.gmra.mxu0 %v1295
      %v1404 = vpop.f32.mrf.mxu0
      %v1405 = vadd.f32 0.0, %v1404
      %v1406 = vpop.f32.mrf.mxu0
      %v1407 = vpop.f32.mrf.mxu0
      %v1408 = vadd.f32 0.0, %v1407
      %v1409 = vpop.f32.mrf.mxu0
      %1410 = vmatprep.mubr.bf16.mxu0 0
      %1411 = vmatmul.mubr.bf16.gmra.mxu0 %v1298
      %v1412 = vpop.f32.mrf.mxu0
      %v1413 = vadd.f32 0.0, %v1412
      %v1414 = vpop.f32.mrf.mxu0
      %v1415 = vpop.f32.mrf.mxu0
      %v1416 = vadd.f32 0.0, %v1415
      %v1417 = vpop.f32.mrf.mxu0
      %1418 = vmatprep.mubr.bf16.mxu0 0
      %1419 = vmatmul.mubr.bf16.gmra.mxu0 %v1301
      %v1420 = vpop.f32.mrf.mxu0
      %v1421 = vadd.f32 0.0, %v1420
      %v1422 = vpop.f32.mrf.mxu0
      %v1423 = vpop.f32.mrf.mxu0
      %v1424 = vadd.f32 0.0, %v1423
      %v1425 = vpop.f32.mrf.mxu0
      %1426 = vmatprep.mubr.bf16.mxu0 0
      %1427 = vmatmul.mubr.bf16.gmra.mxu0 %v1304
      %v1428 = vpop.f32.mrf.mxu0
      %v1429 = vadd.f32 0.0, %v1428
      %v1430 = vpop.f32.mrf.mxu0
      %v1431 = vpop.f32.mrf.mxu0
      %v1432 = vadd.f32 0.0, %v1431
      %v1433 = vpop.f32.mrf.mxu0
      %1434 = vmatprep.mubr.bf16.mxu0 0
      %1435 = vmatmul.mubr.bf16.gmra.mxu0 %v1307
      %v1436 = vpop.f32.mrf.mxu0
      %v1437 = vadd.f32 0.0, %v1436
      %v1438 = vpop.f32.mrf.mxu0
      %v1439 = vpop.f32.mrf.mxu0
      %v1440 = vadd.f32 0.0, %v1439
      %v1441 = vpop.f32.mrf.mxu0
      %1442 = vmatprep.mubr.bf16.mxu0 0
      %1443 = vmatmul.mubr.bf16.gmra.mxu0 %v1310
      %v1444 = vpop.f32.mrf.mxu0
      %v1445 = vadd.f32 0.0, %v1444
      %v1446 = vpop.f32.mrf.mxu0
      %v1447 = vpop.f32.mrf.mxu0
      %v1448 = vadd.f32 0.0, %v1447
      %v1449 = vpop.f32.mrf.mxu0
      %1450 = vmatprep.mubr.bf16.mxu0 0
      %1451 = vmatmul.mubr.bf16.gmra.mxu0 %v1313
      %v1452 = vpop.f32.mrf.mxu0
      %v1453 = vadd.f32 0.0, %v1452
      %v1454 = vpop.f32.mrf.mxu0
      %v1455 = vpop.f32.mrf.mxu0
      %v1456 = vadd.f32 0.0, %v1455
      %v1457 = vpop.f32.mrf.mxu0
      %1458 = vmatprep.mubr.bf16.mxu0 0
      %1459 = vmatmul.mubr.bf16.gmra.mxu0 %v1316
      %v1460 = vpop.f32.mrf.mxu0
      %v1461 = vadd.f32 0.0, %v1460
      %v1462 = vpop.f32.mrf.mxu0
      %v1463 = vpop.f32.mrf.mxu0
      %v1464 = vadd.f32 0.0, %v1463
      %v1465 = vpop.f32.mrf.mxu0
      %1466 = vmatprep.mubr.bf16.mxu0 0
      %1467 = vmatmul.mubr.bf16.gmra.mxu0 %v1319
      %v1468 = vpop.f32.mrf.mxu0
      %v1469 = vadd.f32 0.0, %v1468
      %v1470 = vpop.f32.mrf.mxu0
      %v1471 = vpop.f32.mrf.mxu0
      %v1472 = vadd.f32 0.0, %v1471
      %v1473 = vpop.f32.mrf.mxu0
      %1474 = vmatprep.mubr.bf16.mxu0 0
      %1475 = vmatmul.mubr.bf16.gmra.mxu0 %v1322
      %v1476 = vpop.f32.mrf.mxu0
      %v1477 = vadd.f32 0.0, %v1476
      %v1478 = vpop.f32.mrf.mxu0
      %v1479 = vpop.f32.mrf.mxu0
      %v1480 = vadd.f32 0.0, %v1479
      %v1481 = vpop.f32.mrf.mxu0
      %1482 = vmatprep.mubr.bf16.mxu0 0
      %1483 = vmatmul.mubr.bf16.gmra.mxu0 %v1325
      %v1484 = vpop.f32.mrf.mxu0
      %v1485 = vadd.f32 0.0, %v1484
      %v1486 = vpop.f32.mrf.mxu0
      %v1487 = vpop.f32.mrf.mxu0
      %v1488 = vadd.f32 0.0, %v1487
      %v1489 = vpop.f32.mrf.mxu0
      %1490 = vdwg.mxu0
      %v1491 = vadd.f32 %v1040, %v1365
      %v1492 = vadd.f32 %v1043, %v1368
      %v1493 = vadd.f32 %v1048, %v1373
      %v1494 = vadd.f32 %v1051, %v1376
      %v1495 = vadd.f32 %v1056, %v1381
      %v1496 = vadd.f32 %v1059, %v1384
      %v1497 = vadd.f32 %v1064, %v1389
      %v1498 = vadd.f32 %v1067, %v1392
      %v1499 = vadd.f32 %v1072, %v1397
      %v1500 = vadd.f32 %v1075, %v1400
      %v1501 = vadd.f32 %v1080, %v1405
      %v1502 = vadd.f32 %v1083, %v1408
      %v1503 = vadd.f32 %v1088, %v1413
      %v1504 = vadd.f32 %v1091, %v1416
      %v1505 = vadd.f32 %v1096, %v1421
      %v1506 = vadd.f32 %v1099, %v1424
      %v1507 = vadd.f32 %v1104, %v1429
      %v1508 = vadd.f32 %v1107, %v1432
      %v1509 = vadd.f32 %v1112, %v1437
      %v1510 = vadd.f32 %v1115, %v1440
      %v1511 = vadd.f32 %v1120, %v1445
      %v1512 = vadd.f32 %v1123, %v1448
      %v1513 = vadd.f32 %v1128, %v1453
      %v1514 = vadd.f32 %v1131, %v1456
      %v1515 = vadd.f32 %v1136, %v1461
      %v1516 = vadd.f32 %v1139, %v1464
      %v1517 = vadd.f32 %v1144, %v1469
      %v1518 = vadd.f32 %v1147, %v1472
      %v1519 = vadd.f32 %v1152, %v1477
      %v1520 = vadd.f32 %v1155, %v1480
      %v1521 = vadd.f32 %v1160, %v1485
      %v1522 = vadd.f32 %v1163, %v1488
      %v1523 = vld [vmem:[%s502] sm:$0xf]
      %v1524 = vld [vmem:[%s502 + $0x4] sm:$0xf]
      %v1525 = vld [vmem:[%s502 + $0x8] sm:$0xf]
      %v1526 = vld [vmem:[%s502 + $0xc] sm:$0xf]
      %v1527 = vld [vmem:[%s502 + $0x10] sm:$0xf]
      %v1528 = vld [vmem:[%s502 + $0x14] sm:$0xf]
      %v1529 = vld [vmem:[%s502 + $0x18] sm:$0xf]
      %v1530 = vld [vmem:[%s502 + $0x1c] sm:$0xf]
      %v1531 = vld [vmem:[%s502 + $0x20] sm:$0xf]
      %v1532 = vld [vmem:[%s502 + $0x24] sm:$0xf]
      %v1533 = vld [vmem:[%s502 + $0x28] sm:$0xf]
      %v1534 = vld [vmem:[%s502 + $0x2c] sm:$0xf]
      %v1535 = vld [vmem:[%s502 + $0x30] sm:$0xf]
      %v1536 = vld [vmem:[%s502 + $0x34] sm:$0xf]
      %v1537 = vld [vmem:[%s502 + $0x38] sm:$0xf]
      %v1538 = vld [vmem:[%s502 + $0x3c] sm:$0xf]
      %v1539 = vld [vmem:[%s502 + $0x40] sm:$0xf]
      %v1540 = vld [vmem:[%s502 + $0x44] sm:$0xf]
      %v1541 = vld [vmem:[%s502 + $0x48] sm:$0xf]
      %v1542 = vld [vmem:[%s502 + $0x4c] sm:$0xf]
      %v1543 = vld [vmem:[%s502 + $0x50] sm:$0xf]
      %v1544 = vld [vmem:[%s502 + $0x54] sm:$0xf]
      %v1545 = vld [vmem:[%s502 + $0x58] sm:$0xf]
      %v1546 = vld [vmem:[%s502 + $0x5c] sm:$0xf]
      %v1547 = vld [vmem:[%s502 + $0x60] sm:$0xf]
      %v1548 = vld [vmem:[%s502 + $0x64] sm:$0xf]
      %v1549 = vld [vmem:[%s502 + $0x68] sm:$0xf]
      %v1550 = vld [vmem:[%s502 + $0x6c] sm:$0xf]
      %v1551 = vld [vmem:[%s502 + $0x70] sm:$0xf]
      %v1552 = vld [vmem:[%s502 + $0x74] sm:$0xf]
      %v1553 = vld [vmem:[%s502 + $0x78] sm:$0xf]
      %v1554 = vld [vmem:[%s502 + $0x7c] sm:$0xf]
      %v1555 = vld [vmem:[%s7] sm:$0xf]
      %v1556 = vld [vmem:[%s7 + $0x4] sm:$0xf]
      %v1557 = vld [vmem:[%s7 + $0x8] sm:$0xf]
      %v1558 = vld [vmem:[%s7 + $0xc] sm:$0xf]
      %v1591 = vunpack.c.l.b16 %v1523
      %v1592 = vunpack.c.l.b16 %v1524
      %v1593 = vunpack.c.l.b16 %v1525
      %v1594 = vunpack.c.l.b16 %v1526
      %v1595 = vunpack.c.l.b16 %v1527
      %v1596 = vunpack.c.l.b16 %v1528
      %v1597 = vunpack.c.l.b16 %v1529
      %v1598 = vunpack.c.l.b16 %v1530
      %v1599 = vunpack.c.l.b16 %v1531
      %v1600 = vunpack.c.l.b16 %v1532
      %v1601 = vunpack.c.l.b16 %v1533
      %v1602 = vunpack.c.l.b16 %v1534
      %v1603 = vunpack.c.l.b16 %v1535
      %v1604 = vunpack.c.l.b16 %v1536
      %v1605 = vunpack.c.l.b16 %v1537
      %v1606 = vunpack.c.l.b16 %v1538
      %v1607 = vunpack.c.l.b16 %v1539
      %v1608 = vunpack.c.l.b16 %v1540
      %v1609 = vunpack.c.l.b16 %v1541
      %v1610 = vunpack.c.l.b16 %v1542
      %v1611 = vunpack.c.l.b16 %v1543
      %v1612 = vunpack.c.l.b16 %v1544
      %v1613 = vunpack.c.l.b16 %v1545
      %v1614 = vunpack.c.l.b16 %v1546
      %v1615 = vunpack.c.l.b16 %v1547
      %v1616 = vunpack.c.l.b16 %v1548
      %v1617 = vunpack.c.l.b16 %v1549
      %v1618 = vunpack.c.l.b16 %v1550
      %v1619 = vunpack.c.l.b16 %v1551
      %v1620 = vunpack.c.l.b16 %v1552
      %v1621 = vunpack.c.l.b16 %v1553
      %v1622 = vunpack.c.l.b16 %v1554
      %v1623 = vpack.c.b16 %v1592, %v1591
      %v1624 = vpack.c.b16 %v1594, %v1593
      %v1625 = vpack.c.b16 %v1596, %v1595
      %v1626 = vpack.c.b16 %v1598, %v1597
      %v1627 = vpack.c.b16 %v1600, %v1599
      %v1628 = vpack.c.b16 %v1602, %v1601
      %v1629 = vpack.c.b16 %v1604, %v1603
      %v1630 = vpack.c.b16 %v1606, %v1605
      %v1631 = vpack.c.b16 %v1608, %v1607
      %v1632 = vpack.c.b16 %v1610, %v1609
      %v1633 = vpack.c.b16 %v1612, %v1611
      %v1634 = vpack.c.b16 %v1614, %v1613
      %v1635 = vpack.c.b16 %v1616, %v1615
      %v1636 = vpack.c.b16 %v1618, %v1617
      %v1637 = vpack.c.b16 %v1620, %v1619
      %v1638 = vpack.c.b16 %v1622, %v1621
      %v1643 = vunpack.c.l.b16 %v1555
      %v1644 = vunpack.c.l.b16 %v1556
      %v1645 = vunpack.c.l.b16 %v1557
      %v1646 = vunpack.c.l.b16 %v1558
      %v1647 = vpack.c.b16 %v1644, %v1643
      %v1648 = vpack.c.b16 %v1646, %v1645
      %vm1651 = vcmask 261120
      %v1653 = vsel %vm1651, %v1623, 0
      %v1656 = vsel %vm1651, %v1624, 0
      %v1659 = vsel %vm1651, %v1625, 0
      %v1662 = vsel %vm1651, %v1626, 0
      %v1665 = vsel %vm1651, %v1627, 0
      %v1668 = vsel %vm1651, %v1628, 0
      %v1671 = vsel %vm1651, %v1629, 0
      %v1674 = vsel %vm1651, %v1630, 0
      %v1677 = vsel %vm1651, %v1631, 0
      %v1680 = vsel %vm1651, %v1632, 0
      %v1683 = vsel %vm1651, %v1633, 0
      %v1686 = vsel %vm1651, %v1634, 0
      %v1689 = vsel %vm1651, %v1635, 0
      %v1692 = vsel %vm1651, %v1636, 0
      %v1695 = vsel %vm1651, %v1637, 0
      %v1698 = vsel %vm1651, %v1638, 0
      %1700 = vmatprep.subr.bf16.mxu0 0
      %1701 = vmatpush1.bf16.msra.mxu0 0
      %1702 = vmatprep.subr.bf16.mxu0 0
      %1703 = vmatpush1.bf16.msra.mxu0 0
      %1704 = vmatprep.subr.bf16.mxu0 0
      %1705 = vmatpush1.bf16.msra.mxu0 0
      %1706 = vmatprep.subr.bf16.mxu0 0
      %1707 = vmatpush1.bf16.msra.mxu0 0
      %1708 = vmatprep.subr.bf16.mxu0 0
      %1709 = vmatpush1.bf16.msra.mxu0 0
      %1710 = vmatprep.subr.bf16.mxu0 0
      %1711 = vmatpush1.bf16.msra.mxu0 0
      %1712 = vmatprep.subr.bf16.mxu0 0
      %1713 = vmatpush1.bf16.msra.mxu0 %v1648
      %1714 = vmatprep.subr.bf16.mxu0 0
      %1715 = vmatpush1.bf16.msra.mxu0 %v1647
      %1716 = vmatprep.subr.bf16.mxu0 0
      %1717 = vmatpush2.bf16.msra.mxu0 0
      %1718 = vmatprep.subr.bf16.mxu0 0
      %1719 = vmatpush2.bf16.msra.mxu0 0
      %1720 = vmatprep.subr.bf16.mxu0 0
      %1721 = vmatpush2.bf16.msra.mxu0 0
      %1722 = vmatprep.subr.bf16.mxu0 0
      %1723 = vmatpush2.bf16.msra.mxu0 0
      %1724 = vmatprep.subr.bf16.mxu0 0
      %1725 = vmatpush2.bf16.msra.mxu0 0
      %1726 = vmatprep.subr.bf16.mxu0 0
      %1727 = vmatpush2.bf16.msra.mxu0 0
      %1728 = vmatprep.subr.bf16.mxu0 0
      %1729 = vmatpush2.bf16.msra.mxu0 0
      %1730 = vmatprep.subr.bf16.mxu0 0
      %1731 = vmatpush2.bf16.msra.mxu0 0
      %1732 = vmatprep.mubr.bf16.mxu0 0
      %1733 = vmatmul.mubr.bf16.gmra.mxu0 %v1653
      %v1734 = vpop.f32.mrf.mxu0
      %v1735 = vadd.f32 0.0, %v1734
      %v1736 = vpop.f32.mrf.mxu0
      %v1737 = vpop.f32.mrf.mxu0
      %v1738 = vadd.f32 0.0, %v1737
      %v1739 = vpop.f32.mrf.mxu0
      %1740 = vmatprep.mubr.bf16.mxu0 0
      %1741 = vmatmul.mubr.bf16.gmra.mxu0 %v1656
      %v1742 = vpop.f32.mrf.mxu0
      %v1743 = vadd.f32 0.0, %v1742
      %v1744 = vpop.f32.mrf.mxu0
      %v1745 = vpop.f32.mrf.mxu0
      %v1746 = vadd.f32 0.0, %v1745
      %v1747 = vpop.f32.mrf.mxu0
      %1748 = vmatprep.mubr.bf16.mxu0 0
      %1749 = vmatmul.mubr.bf16.gmra.mxu0 %v1659
      %v1750 = vpop.f32.mrf.mxu0
      %v1751 = vadd.f32 0.0, %v1750
      %v1752 = vpop.f32.mrf.mxu0
      %v1753 = vpop.f32.mrf.mxu0
      %v1754 = vadd.f32 0.0, %v1753
      %v1755 = vpop.f32.mrf.mxu0
      %1756 = vmatprep.mubr.bf16.mxu0 0
      %1757 = vmatmul.mubr.bf16.gmra.mxu0 %v1662
      %v1758 = vpop.f32.mrf.mxu0
      %v1759 = vadd.f32 0.0, %v1758
      %v1760 = vpop.f32.mrf.mxu0
      %v1761 = vpop.f32.mrf.mxu0
      %v1762 = vadd.f32 0.0, %v1761
      %v1763 = vpop.f32.mrf.mxu0
      %1764 = vmatprep.mubr.bf16.mxu0 0
      %1765 = vmatmul.mubr.bf16.gmra.mxu0 %v1665
      %v1766 = vpop.f32.mrf.mxu0
      %v1767 = vadd.f32 0.0, %v1766
      %v1768 = vpop.f32.mrf.mxu0
      %v1769 = vpop.f32.mrf.mxu0
      %v1770 = vadd.f32 0.0, %v1769
      %v1771 = vpop.f32.mrf.mxu0
      %1772 = vmatprep.mubr.bf16.mxu0 0
      %1773 = vmatmul.mubr.bf16.gmra.mxu0 %v1668
      %v1774 = vpop.f32.mrf.mxu0
      %v1775 = vadd.f32 0.0, %v1774
      %v1776 = vpop.f32.mrf.mxu0
      %v1777 = vpop.f32.mrf.mxu0
      %v1778 = vadd.f32 0.0, %v1777
      %v1779 = vpop.f32.mrf.mxu0
      %1780 = vmatprep.mubr.bf16.mxu0 0
      %1781 = vmatmul.mubr.bf16.gmra.mxu0 %v1671
      %v1782 = vpop.f32.mrf.mxu0
      %v1783 = vadd.f32 0.0, %v1782
      %v1784 = vpop.f32.mrf.mxu0
      %v1785 = vpop.f32.mrf.mxu0
      %v1786 = vadd.f32 0.0, %v1785
      %v1787 = vpop.f32.mrf.mxu0
      %1788 = vmatprep.mubr.bf16.mxu0 0
      %1789 = vmatmul.mubr.bf16.gmra.mxu0 %v1674
      %v1790 = vpop.f32.mrf.mxu0
      %v1791 = vadd.f32 0.0, %v1790
      %v1792 = vpop.f32.mrf.mxu0
      %v1793 = vpop.f32.mrf.mxu0
      %v1794 = vadd.f32 0.0, %v1793
      %v1795 = vpop.f32.mrf.mxu0
      %1796 = vmatprep.mubr.bf16.mxu0 0
      %1797 = vmatmul.mubr.bf16.gmra.mxu0 %v1677
      %v1798 = vpop.f32.mrf.mxu0
      %v1799 = vadd.f32 0.0, %v1798
      %v1800 = vpop.f32.mrf.mxu0
      %v1801 = vpop.f32.mrf.mxu0
      %v1802 = vadd.f32 0.0, %v1801
      %v1803 = vpop.f32.mrf.mxu0
      %1804 = vmatprep.mubr.bf16.mxu0 0
      %1805 = vmatmul.mubr.bf16.gmra.mxu0 %v1680
      %v1806 = vpop.f32.mrf.mxu0
      %v1807 = vadd.f32 0.0, %v1806
      %v1808 = vpop.f32.mrf.mxu0
      %v1809 = vpop.f32.mrf.mxu0
      %v1810 = vadd.f32 0.0, %v1809
      %v1811 = vpop.f32.mrf.mxu0
      %1812 = vmatprep.mubr.bf16.mxu0 0
      %1813 = vmatmul.mubr.bf16.gmra.mxu0 %v1683
      %v1814 = vpop.f32.mrf.mxu0
      %v1815 = vadd.f32 0.0, %v1814
      %v1816 = vpop.f32.mrf.mxu0
      %v1817 = vpop.f32.mrf.mxu0
      %v1818 = vadd.f32 0.0, %v1817
      %v1819 = vpop.f32.mrf.mxu0
      %1820 = vmatprep.mubr.bf16.mxu0 0
      %1821 = vmatmul.mubr.bf16.gmra.mxu0 %v1686
      %v1822 = vpop.f32.mrf.mxu0
      %v1823 = vadd.f32 0.0, %v1822
      %v1824 = vpop.f32.mrf.mxu0
      %v1825 = vpop.f32.mrf.mxu0
      %v1826 = vadd.f32 0.0, %v1825
      %v1827 = vpop.f32.mrf.mxu0
      %1828 = vmatprep.mubr.bf16.mxu0 0
      %1829 = vmatmul.mubr.bf16.gmra.mxu0 %v1689
      %v1830 = vpop.f32.mrf.mxu0
      %v1831 = vadd.f32 0.0, %v1830
      %v1832 = vpop.f32.mrf.mxu0
      %v1833 = vpop.f32.mrf.mxu0
      %v1834 = vadd.f32 0.0, %v1833
      %v1835 = vpop.f32.mrf.mxu0
      %1836 = vmatprep.mubr.bf16.mxu0 0
      %1837 = vmatmul.mubr.bf16.gmra.mxu0 %v1692
      %v1838 = vpop.f32.mrf.mxu0
      %v1839 = vadd.f32 0.0, %v1838
      %v1840 = vpop.f32.mrf.mxu0
      %v1841 = vpop.f32.mrf.mxu0
      %v1842 = vadd.f32 0.0, %v1841
      %v1843 = vpop.f32.mrf.mxu0
      %1844 = vmatprep.mubr.bf16.mxu0 0
      %1845 = vmatmul.mubr.bf16.gmra.mxu0 %v1695
      %v1846 = vpop.f32.mrf.mxu0
      %v1847 = vadd.f32 0.0, %v1846
      %v1848 = vpop.f32.mrf.mxu0
      %v1849 = vpop.f32.mrf.mxu0
      %v1850 = vadd.f32 0.0, %v1849
      %v1851 = vpop.f32.mrf.mxu0
      %1852 = vmatprep.mubr.bf16.mxu0 0
      %1853 = vmatmul.mubr.bf16.gmra.mxu0 %v1698
      %v1854 = vpop.f32.mrf.mxu0
      %v1855 = vadd.f32 0.0, %v1854
      %v1856 = vpop.f32.mrf.mxu0
      %v1857 = vpop.f32.mrf.mxu0
      %v1858 = vadd.f32 0.0, %v1857
      %v1859 = vpop.f32.mrf.mxu0
      %1860 = vdwg.mxu0
      %v1861 = vadd.f32 %v1491, %v1735
      %v1862 = vadd.f32 %v1492, %v1738
      %v1863 = vadd.f32 %v1493, %v1743
      %v1864 = vadd.f32 %v1494, %v1746
      %v1865 = vadd.f32 %v1495, %v1751
      %v1866 = vadd.f32 %v1496, %v1754
      %v1867 = vadd.f32 %v1497, %v1759
      %v1868 = vadd.f32 %v1498, %v1762
      %v1869 = vadd.f32 %v1499, %v1767
      %v1870 = vadd.f32 %v1500, %v1770
      %v1871 = vadd.f32 %v1501, %v1775
      %v1872 = vadd.f32 %v1502, %v1778
      %v1873 = vadd.f32 %v1503, %v1783
      %v1874 = vadd.f32 %v1504, %v1786
      %v1875 = vadd.f32 %v1505, %v1791
      %v1876 = vadd.f32 %v1506, %v1794
      %v1877 = vadd.f32 %v1507, %v1799
      %v1878 = vadd.f32 %v1508, %v1802
      %v1879 = vadd.f32 %v1509, %v1807
      %v1880 = vadd.f32 %v1510, %v1810
      %v1881 = vadd.f32 %v1511, %v1815
      %v1882 = vadd.f32 %v1512, %v1818
      %v1883 = vadd.f32 %v1513, %v1823
      %v1884 = vadd.f32 %v1514, %v1826
      %v1885 = vadd.f32 %v1515, %v1831
      %v1886 = vadd.f32 %v1516, %v1834
      %v1887 = vadd.f32 %v1517, %v1839
      %v1888 = vadd.f32 %v1518, %v1842
      %v1889 = vadd.f32 %v1519, %v1847
      %v1890 = vadd.f32 %v1520, %v1850
      %v1891 = vadd.f32 %v1521, %v1855
      %v1892 = vadd.f32 %v1522, %v1858
      %v1893 = vld [vmem:[%s8] sm:$0x1]
      %v1895 = vlaneseq
      %v1896 = vshrl.u32 %v1895, 7
      %v1897 = vsub.s32 0, %v1896
      %v1898 = vrot.slane %v1893, %v1897
      %v1900 = vadd.f32 %v1861, %v1898
      %v1901 = vadd.f32 %v1862, %v1898
      %v1902 = vadd.f32 %v1863, %v1898
      %v1903 = vadd.f32 %v1864, %v1898
      %v1904 = vadd.f32 %v1865, %v1898
      %v1905 = vadd.f32 %v1866, %v1898
      %v1906 = vadd.f32 %v1867, %v1898
      %v1907 = vadd.f32 %v1868, %v1898
      %v1908 = vadd.f32 %v1869, %v1898
      %v1909 = vadd.f32 %v1870, %v1898
      %v1910 = vadd.f32 %v1871, %v1898
      %v1911 = vadd.f32 %v1872, %v1898
      %v1912 = vadd.f32 %v1873, %v1898
      %v1913 = vadd.f32 %v1874, %v1898
      %v1914 = vadd.f32 %v1875, %v1898
      %v1915 = vadd.f32 %v1876, %v1898
      %v1916 = vadd.f32 %v1877, %v1898
      %v1917 = vadd.f32 %v1878, %v1898
      %v1918 = vadd.f32 %v1879, %v1898
      %v1919 = vadd.f32 %v1880, %v1898
      %v1920 = vadd.f32 %v1881, %v1898
      %v1921 = vadd.f32 %v1882, %v1898
      %v1922 = vadd.f32 %v1883, %v1898
      %v1923 = vadd.f32 %v1884, %v1898
      %v1924 = vadd.f32 %v1885, %v1898
      %v1925 = vadd.f32 %v1886, %v1898
      %v1926 = vadd.f32 %v1887, %v1898
      %v1927 = vadd.f32 %v1888, %v1898
      %v1928 = vadd.f32 %v1889, %v1898
      %v1929 = vadd.f32 %v1890, %v1898
      %v1930 = vadd.f32 %v1891, %v1898
      %v1931 = vadd.f32 %v1892, %v1898
      %v1932 = vmax.f32 %v1900, 0.0
      %v1933 = vmax.f32 %v1901, 0.0
      %v1934 = vmax.f32 %v1902, 0.0
      %v1935 = vmax.f32 %v1903, 0.0
      %v1936 = vmax.f32 %v1904, 0.0
      %v1937 = vmax.f32 %v1905, 0.0
      %v1938 = vmax.f32 %v1906, 0.0
      %v1939 = vmax.f32 %v1907, 0.0
      %v1940 = vmax.f32 %v1908, 0.0
      %v1941 = vmax.f32 %v1909, 0.0
      %v1942 = vmax.f32 %v1910, 0.0
      %v1943 = vmax.f32 %v1911, 0.0
      %v1944 = vmax.f32 %v1912, 0.0
      %v1945 = vmax.f32 %v1913, 0.0
      %v1946 = vmax.f32 %v1914, 0.0
      %v1947 = vmax.f32 %v1915, 0.0
      %v1948 = vmax.f32 %v1916, 0.0
      %v1949 = vmax.f32 %v1917, 0.0
      %v1950 = vmax.f32 %v1918, 0.0
      %v1951 = vmax.f32 %v1919, 0.0
      %v1952 = vmax.f32 %v1920, 0.0
      %v1953 = vmax.f32 %v1921, 0.0
      %v1954 = vmax.f32 %v1922, 0.0
      %v1955 = vmax.f32 %v1923, 0.0
      %v1956 = vmax.f32 %v1924, 0.0
      %v1957 = vmax.f32 %v1925, 0.0
      %v1958 = vmax.f32 %v1926, 0.0
      %v1959 = vmax.f32 %v1927, 0.0
      %v1960 = vmax.f32 %v1928, 0.0
      %v1961 = vmax.f32 %v1929, 0.0
      %v1962 = vmax.f32 %v1930, 0.0
      %v1963 = vmax.f32 %v1931, 0.0
      %v1964 = vld [vmem:[%s9] sm:$0xf]
      %v1965 = vld [vmem:[%s9 + $0x4] sm:$0xf]
      %v1966 = vld [vmem:[%s9 + $0x8] sm:$0xf]
      %v1967 = vld [vmem:[%s9 + $0xc] sm:$0xf]
      %v1968 = vld [vmem:[%s9 + $0x10] sm:$0xf]
      %v1969 = vld [vmem:[%s9 + $0x14] sm:$0xf]
      %v1970 = vld [vmem:[%s9 + $0x18] sm:$0xf]
      %v1971 = vld [vmem:[%s9 + $0x1c] sm:$0xf]
      %v1972 = vld [vmem:[%s10] sm:$0x1]
      %v1973 = vpack.c.bf16 %v1933, %v1932
      %v1974 = vpack.c.bf16 %v1935, %v1934
      %v1975 = vpack.c.bf16 %v1937, %v1936
      %v1976 = vpack.c.bf16 %v1939, %v1938
      %v1977 = vpack.c.bf16 %v1941, %v1940
      %v1978 = vpack.c.bf16 %v1943, %v1942
      %v1979 = vpack.c.bf16 %v1945, %v1944
      %v1980 = vpack.c.bf16 %v1947, %v1946
      %v1981 = vpack.c.bf16 %v1949, %v1948
      %v1982 = vpack.c.bf16 %v1951, %v1950
      %v1983 = vpack.c.bf16 %v1953, %v1952
      %v1984 = vpack.c.bf16 %v1955, %v1954
      %v1985 = vpack.c.bf16 %v1957, %v1956
      %v1986 = vpack.c.bf16 %v1959, %v1958
      %v1987 = vpack.c.bf16 %v1961, %v1960
      %v1988 = vpack.c.bf16 %v1963, %v1962
      %v1990 = vlaneseq
      %v1991 = vshrl.u32 %v1990, 7
      %v1992 = vsub.s32 0, %v1991
      %v1993 = vrot.slane %v1972, %v1992
      %v2003 = vunpack.c.l.b16 %v1964
      %v2004 = vunpack.c.l.b16 %v1965
      %v2005 = vunpack.c.l.b16 %v1966
      %v2006 = vunpack.c.l.b16 %v1967
      %v2007 = vunpack.c.l.b16 %v1968
      %v2008 = vunpack.c.l.b16 %v1969
      %v2009 = vunpack.c.l.b16 %v1970
      %v2010 = vunpack.c.l.b16 %v1971
      %v2011 = vpack.c.b16 %v2004, %v2003
      %v2012 = vpack.c.b16 %v2006, %v2005
      %v2013 = vpack.c.b16 %v2008, %v2007
      %v2014 = vpack.c.b16 %v2010, %v2009
      %vm2019 = vcmask 523264
      %v2021 = vsel %vm2019, %v1973, 0
      %v2024 = vsel %vm2019, %v1974, 0
      %v2027 = vsel %vm2019, %v1975, 0
      %v2030 = vsel %vm2019, %v1976, 0
      %v2033 = vsel %vm2019, %v1977, 0
      %v2036 = vsel %vm2019, %v1978, 0
      %v2039 = vsel %vm2019, %v1979, 0
      %v2042 = vsel %vm2019, %v1980, 0
      %v2045 = vsel %vm2019, %v1981, 0
      %v2048 = vsel %vm2019, %v1982, 0
      %v2051 = vsel %vm2019, %v1983, 0
      %v2054 = vsel %vm2019, %v1984, 0
      %v2057 = vsel %vm2019, %v1985, 0
      %v2060 = vsel %vm2019, %v1986, 0
      %v2063 = vsel %vm2019, %v1987, 0
      %v2066 = vsel %vm2019, %v1988, 0
      %2068 = vmatprep.subr.bf16.mxu0 0
      %2069 = vmatpush1.bf16.msra.mxu0 0
      %2070 = vmatprep.subr.bf16.mxu0 0
      %2071 = vmatpush1.bf16.msra.mxu0 0
      %2072 = vmatprep.subr.bf16.mxu0 0
      %2073 = vmatpush1.bf16.msra.mxu0 0
      %2074 = vmatprep.subr.bf16.mxu0 0
      %2075 = vmatpush1.bf16.msra.mxu0 0
      %2076 = vmatprep.subr.bf16.mxu0 0
      %2077 = vmatpush1.bf16.msra.mxu0 %v2014
      %2078 = vmatprep.subr.bf16.mxu0 0
      %2079 = vmatpush1.bf16.msra.mxu0 %v2013
      %2080 = vmatprep.subr.bf16.mxu0 0
      %2081 = vmatpush1.bf16.msra.mxu0 %v2012
      %2082 = vmatprep.subr.bf16.mxu0 0
      %2083 = vmatpush1.bf16.msra.mxu0 %v2011
      %2084 = vmatprep.subr.bf16.mxu0 0
      %2085 = vmatpush2.bf16.msra.mxu0 0
      %2086 = vmatprep.subr.bf16.mxu0 0
      %2087 = vmatpush2.bf16.msra.mxu0 0
      %2088 = vmatprep.subr.bf16.mxu0 0
      %2089 = vmatpush2.bf16.msra.mxu0 0
      %2090 = vmatprep.subr.bf16.mxu0 0
      %2091 = vmatpush2.bf16.msra.mxu0 0
      %2092 = vmatprep.subr.bf16.mxu0 0
      %2093 = vmatpush2.bf16.msra.mxu0 0
      %2094 = vmatprep.subr.bf16.mxu0 0
      %2095 = vmatpush2.bf16.msra.mxu0 0
      %2096 = vmatprep.subr.bf16.mxu0 0
      %2097 = vmatpush2.bf16.msra.mxu0 0
      %2098 = vmatprep.subr.bf16.mxu0 0
      %2099 = vmatpush2.bf16.msra.mxu0 0
      %2100 = vmatprep.mubr.bf16.mxu0 0
      %2101 = vmatmul.mubr.bf16.gmra.mxu0 %v2021
      %v2102 = vpop.f32.mrf.mxu0
      %v2103 = vadd.f32 %v1993, %v2102
      %v2104 = vpop.f32.mrf.mxu0
      %v2105 = vpop.f32.mrf.mxu0
      %v2106 = vadd.f32 %v1993, %v2105
      %v2107 = vpop.f32.mrf.mxu0
      %2108 = vmatprep.mubr.bf16.mxu0 0
      %2109 = vmatmul.mubr.bf16.gmra.mxu0 %v2024
      %v2110 = vpop.f32.mrf.mxu0
      %v2111 = vadd.f32 %v1993, %v2110
      %v2112 = vpop.f32.mrf.mxu0
      %v2113 = vpop.f32.mrf.mxu0
      %v2114 = vadd.f32 %v1993, %v2113
      %v2115 = vpop.f32.mrf.mxu0
      %2116 = vmatprep.mubr.bf16.mxu0 0
      %2117 = vmatmul.mubr.bf16.gmra.mxu0 %v2027
      %v2118 = vpop.f32.mrf.mxu0
      %v2119 = vadd.f32 %v1993, %v2118
      %v2120 = vpop.f32.mrf.mxu0
      %v2121 = vpop.f32.mrf.mxu0
      %v2122 = vadd.f32 %v1993, %v2121
      %v2123 = vpop.f32.mrf.mxu0
      %2124 = vmatprep.mubr.bf16.mxu0 0
      %2125 = vmatmul.mubr.bf16.gmra.mxu0 %v2030
      %v2126 = vpop.f32.mrf.mxu0
      %v2127 = vadd.f32 %v1993, %v2126
      %v2128 = vpop.f32.mrf.mxu0
      %v2129 = vpop.f32.mrf.mxu0
      %v2130 = vadd.f32 %v1993, %v2129
      %v2131 = vpop.f32.mrf.mxu0
      %2132 = vmatprep.mubr.bf16.mxu0 0
      %2133 = vmatmul.mubr.bf16.gmra.mxu0 %v2033
      %v2134 = vpop.f32.mrf.mxu0
      %v2135 = vadd.f32 %v1993, %v2134
      %v2136 = vpop.f32.mrf.mxu0
      %v2137 = vpop.f32.mrf.mxu0
      %v2138 = vadd.f32 %v1993, %v2137
      %v2139 = vpop.f32.mrf.mxu0
      %2140 = vmatprep.mubr.bf16.mxu0 0
      %2141 = vmatmul.mubr.bf16.gmra.mxu0 %v2036
      %v2142 = vpop.f32.mrf.mxu0
      %v2143 = vadd.f32 %v1993, %v2142
      %v2144 = vpop.f32.mrf.mxu0
      %v2145 = vpop.f32.mrf.mxu0
      %v2146 = vadd.f32 %v1993, %v2145
      %v2147 = vpop.f32.mrf.mxu0
      %2148 = vmatprep.mubr.bf16.mxu0 0
      %2149 = vmatmul.mubr.bf16.gmra.mxu0 %v2039
      %v2150 = vpop.f32.mrf.mxu0
      %v2151 = vadd.f32 %v1993, %v2150
      %v2152 = vpop.f32.mrf.mxu0
      %v2153 = vpop.f32.mrf.mxu0
      %v2154 = vadd.f32 %v1993, %v2153
      %v2155 = vpop.f32.mrf.mxu0
      %2156 = vmatprep.mubr.bf16.mxu0 0
      %2157 = vmatmul.mubr.bf16.gmra.mxu0 %v2042
      %v2158 = vpop.f32.mrf.mxu0
      %v2159 = vadd.f32 %v1993, %v2158
      %v2160 = vpop.f32.mrf.mxu0
      %v2161 = vpop.f32.mrf.mxu0
      %v2162 = vadd.f32 %v1993, %v2161
      %v2163 = vpop.f32.mrf.mxu0
      %2164 = vmatprep.mubr.bf16.mxu0 0
      %2165 = vmatmul.mubr.bf16.gmra.mxu0 %v2045
      %v2166 = vpop.f32.mrf.mxu0
      %v2167 = vadd.f32 %v1993, %v2166
      %v2168 = vpop.f32.mrf.mxu0
      %v2169 = vpop.f32.mrf.mxu0
      %v2170 = vadd.f32 %v1993, %v2169
      %v2171 = vpop.f32.mrf.mxu0
      %2172 = vmatprep.mubr.bf16.mxu0 0
      %2173 = vmatmul.mubr.bf16.gmra.mxu0 %v2048
      %v2174 = vpop.f32.mrf.mxu0
      %v2175 = vadd.f32 %v1993, %v2174
      %v2176 = vpop.f32.mrf.mxu0
      %v2177 = vpop.f32.mrf.mxu0
      %v2178 = vadd.f32 %v1993, %v2177
      %v2179 = vpop.f32.mrf.mxu0
      %2180 = vmatprep.mubr.bf16.mxu0 0
      %2181 = vmatmul.mubr.bf16.gmra.mxu0 %v2051
      %v2182 = vpop.f32.mrf.mxu0
      %v2183 = vadd.f32 %v1993, %v2182
      %v2184 = vpop.f32.mrf.mxu0
      %v2185 = vpop.f32.mrf.mxu0
      %v2186 = vadd.f32 %v1993, %v2185
      %v2187 = vpop.f32.mrf.mxu0
      %2188 = vmatprep.mubr.bf16.mxu0 0
      %2189 = vmatmul.mubr.bf16.gmra.mxu0 %v2054
      %v2190 = vpop.f32.mrf.mxu0
      %v2191 = vadd.f32 %v1993, %v2190
      %v2192 = vpop.f32.mrf.mxu0
      %v2193 = vpop.f32.mrf.mxu0
      %v2194 = vadd.f32 %v1993, %v2193
      %v2195 = vpop.f32.mrf.mxu0
      %2196 = vmatprep.mubr.bf16.mxu0 0
      %2197 = vmatmul.mubr.bf16.gmra.mxu0 %v2057
      %v2198 = vpop.f32.mrf.mxu0
      %v2199 = vadd.f32 %v1993, %v2198
      %v2200 = vpop.f32.mrf.mxu0
      %v2201 = vpop.f32.mrf.mxu0
      %v2202 = vadd.f32 %v1993, %v2201
      %v2203 = vpop.f32.mrf.mxu0
      %2204 = vmatprep.mubr.bf16.mxu0 0
      %2205 = vmatmul.mubr.bf16.gmra.mxu0 %v2060
      %v2206 = vpop.f32.mrf.mxu0
      %v2207 = vadd.f32 %v1993, %v2206
      %v2208 = vpop.f32.mrf.mxu0
      %v2209 = vpop.f32.mrf.mxu0
      %v2210 = vadd.f32 %v1993, %v2209
      %v2211 = vpop.f32.mrf.mxu0
      %2212 = vmatprep.mubr.bf16.mxu0 0
      %2213 = vmatmul.mubr.bf16.gmra.mxu0 %v2063
      %v2214 = vpop.f32.mrf.mxu0
      %v2215 = vadd.f32 %v1993, %v2214
      %v2216 = vpop.f32.mrf.mxu0
      %v2217 = vpop.f32.mrf.mxu0
      %v2218 = vadd.f32 %v1993, %v2217
      %v2219 = vpop.f32.mrf.mxu0
      %2220 = vmatprep.mubr.bf16.mxu0 0
      %2221 = vmatmul.mubr.bf16.gmra.mxu0 %v2066
      %v2222 = vpop.f32.mrf.mxu0
      %v2223 = vadd.f32 %v1993, %v2222
      %v2224 = vpop.f32.mrf.mxu0
      %v2225 = vpop.f32.mrf.mxu0
      %v2226 = vadd.f32 %v1993, %v2225
      %v2227 = vpop.f32.mrf.mxu0
      %2228 = vdwg.mxu0
      %v2229 = vmax.f32 %v2103, 0.0
      %v2230 = vmax.f32 %v2106, 0.0
      %v2231 = vmax.f32 %v2111, 0.0
      %v2232 = vmax.f32 %v2114, 0.0
      %v2233 = vmax.f32 %v2119, 0.0
      %v2234 = vmax.f32 %v2122, 0.0
      %v2235 = vmax.f32 %v2127, 0.0
      %v2236 = vmax.f32 %v2130, 0.0
      %v2237 = vmax.f32 %v2135, 0.0
      %v2238 = vmax.f32 %v2138, 0.0
      %v2239 = vmax.f32 %v2143, 0.0
      %v2240 = vmax.f32 %v2146, 0.0
      %v2241 = vmax.f32 %v2151, 0.0
      %v2242 = vmax.f32 %v2154, 0.0
      %v2243 = vmax.f32 %v2159, 0.0
      %v2244 = vmax.f32 %v2162, 0.0
      %v2245 = vmax.f32 %v2167, 0.0
      %v2246 = vmax.f32 %v2170, 0.0
      %v2247 = vmax.f32 %v2175, 0.0
      %v2248 = vmax.f32 %v2178, 0.0
      %v2249 = vmax.f32 %v2183, 0.0
      %v2250 = vmax.f32 %v2186, 0.0
      %v2251 = vmax.f32 %v2191, 0.0
      %v2252 = vmax.f32 %v2194, 0.0
      %v2253 = vmax.f32 %v2199, 0.0
      %v2254 = vmax.f32 %v2202, 0.0
      %v2255 = vmax.f32 %v2207, 0.0
      %v2256 = vmax.f32 %v2210, 0.0
      %v2257 = vmax.f32 %v2215, 0.0
      %v2258 = vmax.f32 %v2218, 0.0
      %v2259 = vmax.f32 %v2223, 0.0
      %v2260 = vmax.f32 %v2226, 0.0
      %v2261 = vld [vmem:[%s11] sm:$0xf]
      %v2262 = vld [vmem:[%s11 + $0x4] sm:$0xf]
      %v2263 = vld [vmem:[%s11 + $0x8] sm:$0xf]
      %v2264 = vld [vmem:[%s11 + $0xc] sm:$0xf]
      %v2265 = vld [vmem:[%s11 + $0x10] sm:$0xf]
      %v2266 = vld [vmem:[%s11 + $0x14] sm:$0xf]
      %v2267 = vld [vmem:[%s11 + $0x18] sm:$0xf]
      %v2268 = vld [vmem:[%s11 + $0x1c] sm:$0xf]
      %v2269 = vld [vmem:[%s12] sm:$0x1]
      %v2270 = vpack.c.bf16 %v2230, %v2229
      %v2271 = vpack.c.bf16 %v2232, %v2231
      %v2272 = vpack.c.bf16 %v2234, %v2233
      %v2273 = vpack.c.bf16 %v2236, %v2235
      %v2274 = vpack.c.bf16 %v2238, %v2237
      %v2275 = vpack.c.bf16 %v2240, %v2239
      %v2276 = vpack.c.bf16 %v2242, %v2241
      %v2277 = vpack.c.bf16 %v2244, %v2243
      %v2278 = vpack.c.bf16 %v2246, %v2245
      %v2279 = vpack.c.bf16 %v2248, %v2247
      %v2280 = vpack.c.bf16 %v2250, %v2249
      %v2281 = vpack.c.bf16 %v2252, %v2251
      %v2282 = vpack.c.bf16 %v2254, %v2253
      %v2283 = vpack.c.bf16 %v2256, %v2255
      %v2284 = vpack.c.bf16 %v2258, %v2257
      %v2285 = vpack.c.bf16 %v2260, %v2259
      %v2287 = vlaneseq
      %v2288 = vshrl.u32 %v2287, 7
      %v2289 = vsub.s32 0, %v2288
      %v2290 = vrot.slane %v2269, %v2289
      %v2300 = vunpack.c.l.b16 %v2261
      %v2301 = vunpack.c.l.b16 %v2262
      %v2302 = vunpack.c.l.b16 %v2263
      %v2303 = vunpack.c.l.b16 %v2264
      %v2304 = vunpack.c.l.b16 %v2265
      %v2305 = vunpack.c.l.b16 %v2266
      %v2306 = vunpack.c.l.b16 %v2267
      %v2307 = vunpack.c.l.b16 %v2268
      %v2308 = vpack.c.b16 %v2301, %v2300
      %v2309 = vpack.c.b16 %v2303, %v2302
      %v2310 = vpack.c.b16 %v2305, %v2304
      %v2311 = vpack.c.b16 %v2307, %v2306
      %v2317 = vsel %vm2019, %v2270, 0
      %v2320 = vsel %vm2019, %v2271, 0
      %v2323 = vsel %vm2019, %v2272, 0
      %v2326 = vsel %vm2019, %v2273, 0
      %v2329 = vsel %vm2019, %v2274, 0
      %v2332 = vsel %vm2019, %v2275, 0
      %v2335 = vsel %vm2019, %v2276, 0
      %v2338 = vsel %vm2019, %v2277, 0
      %v2341 = vsel %vm2019, %v2278, 0
      %v2344 = vsel %vm2019, %v2279, 0
      %v2347 = vsel %vm2019, %v2280, 0
      %v2350 = vsel %vm2019, %v2281, 0
      %v2353 = vsel %vm2019, %v2282, 0
      %v2356 = vsel %vm2019, %v2283, 0
      %v2359 = vsel %vm2019, %v2284, 0
      %v2362 = vsel %vm2019, %v2285, 0
      %2364 = vmatprep.subr.bf16.mxu0 0
      %2365 = vmatpush1.bf16.msra.mxu0 0
      %2366 = vmatprep.subr.bf16.mxu0 0
      %2367 = vmatpush1.bf16.msra.mxu0 0
      %2368 = vmatprep.subr.bf16.mxu0 0
      %2369 = vmatpush1.bf16.msra.mxu0 0
      %2370 = vmatprep.subr.bf16.mxu0 0
      %2371 = vmatpush1.bf16.msra.mxu0 0
      %2372 = vmatprep.subr.bf16.mxu0 0
      %2373 = vmatpush1.bf16.msra.mxu0 %v2311
      %2374 = vmatprep.subr.bf16.mxu0 0
      %2375 = vmatpush1.bf16.msra.mxu0 %v2310
      %2376 = vmatprep.subr.bf16.mxu0 0
      %2377 = vmatpush1.bf16.msra.mxu0 %v2309
      %2378 = vmatprep.subr.bf16.mxu0 0
      %2379 = vmatpush1.bf16.msra.mxu0 %v2308
      %2380 = vmatprep.subr.bf16.mxu0 0
      %2381 = vmatpush2.bf16.msra.mxu0 0
      %2382 = vmatprep.subr.bf16.mxu0 0
      %2383 = vmatpush2.bf16.msra.mxu0 0
      %2384 = vmatprep.subr.bf16.mxu0 0
      %2385 = vmatpush2.bf16.msra.mxu0 0
      %2386 = vmatprep.subr.bf16.mxu0 0
      %2387 = vmatpush2.bf16.msra.mxu0 0
      %2388 = vmatprep.subr.bf16.mxu0 0
      %2389 = vmatpush2.bf16.msra.mxu0 0
      %2390 = vmatprep.subr.bf16.mxu0 0
      %2391 = vmatpush2.bf16.msra.mxu0 0
      %2392 = vmatprep.subr.bf16.mxu0 0
      %2393 = vmatpush2.bf16.msra.mxu0 0
      %2394 = vmatprep.subr.bf16.mxu0 0
      %2395 = vmatpush2.bf16.msra.mxu0 0
      %2396 = vmatprep.mubr.bf16.mxu0 0
      %2397 = vmatmul.mubr.bf16.gmra.mxu0 %v2317
      %v2398 = vpop.f32.mrf.mxu0
      %v2399 = vadd.f32 %v2290, %v2398
      %v2400 = vpop.f32.mrf.mxu0
      %v2401 = vpop.f32.mrf.mxu0
      %v2402 = vadd.f32 %v2290, %v2401
      %v2403 = vpop.f32.mrf.mxu0
      %2404 = vmatprep.mubr.bf16.mxu0 0
      %2405 = vmatmul.mubr.bf16.gmra.mxu0 %v2320
      %v2406 = vpop.f32.mrf.mxu0
      %v2407 = vadd.f32 %v2290, %v2406
      %v2408 = vpop.f32.mrf.mxu0
      %v2409 = vpop.f32.mrf.mxu0
      %v2410 = vadd.f32 %v2290, %v2409
      %v2411 = vpop.f32.mrf.mxu0
      %2412 = vmatprep.mubr.bf16.mxu0 0
      %2413 = vmatmul.mubr.bf16.gmra.mxu0 %v2323
      %v2414 = vpop.f32.mrf.mxu0
      %v2415 = vadd.f32 %v2290, %v2414
      %v2416 = vpop.f32.mrf.mxu0
      %v2417 = vpop.f32.mrf.mxu0
      %v2418 = vadd.f32 %v2290, %v2417
      %v2419 = vpop.f32.mrf.mxu0
      %2420 = vmatprep.mubr.bf16.mxu0 0
      %2421 = vmatmul.mubr.bf16.gmra.mxu0 %v2326
      %v2422 = vpop.f32.mrf.mxu0
      %v2423 = vadd.f32 %v2290, %v2422
      %v2424 = vpop.f32.mrf.mxu0
      %v2425 = vpop.f32.mrf.mxu0
      %v2426 = vadd.f32 %v2290, %v2425
      %v2427 = vpop.f32.mrf.mxu0
      %2428 = vmatprep.mubr.bf16.mxu0 0
      %2429 = vmatmul.mubr.bf16.gmra.mxu0 %v2329
      %v2430 = vpop.f32.mrf.mxu0
      %v2431 = vadd.f32 %v2290, %v2430
      %v2432 = vpop.f32.mrf.mxu0
      %v2433 = vpop.f32.mrf.mxu0
      %v2434 = vadd.f32 %v2290, %v2433
      %v2435 = vpop.f32.mrf.mxu0
      %2436 = vmatprep.mubr.bf16.mxu0 0
      %2437 = vmatmul.mubr.bf16.gmra.mxu0 %v2332
      %v2438 = vpop.f32.mrf.mxu0
      %v2439 = vadd.f32 %v2290, %v2438
      %v2440 = vpop.f32.mrf.mxu0
      %v2441 = vpop.f32.mrf.mxu0
      %v2442 = vadd.f32 %v2290, %v2441
      %v2443 = vpop.f32.mrf.mxu0
      %2444 = vmatprep.mubr.bf16.mxu0 0
      %2445 = vmatmul.mubr.bf16.gmra.mxu0 %v2335
      %v2446 = vpop.f32.mrf.mxu0
      %v2447 = vadd.f32 %v2290, %v2446
      %v2448 = vpop.f32.mrf.mxu0
      %v2449 = vpop.f32.mrf.mxu0
      %v2450 = vadd.f32 %v2290, %v2449
      %v2451 = vpop.f32.mrf.mxu0
      %2452 = vmatprep.mubr.bf16.mxu0 0
      %2453 = vmatmul.mubr.bf16.gmra.mxu0 %v2338
      %v2454 = vpop.f32.mrf.mxu0
      %v2455 = vadd.f32 %v2290, %v2454
      %v2456 = vpop.f32.mrf.mxu0
      %v2457 = vpop.f32.mrf.mxu0
      %v2458 = vadd.f32 %v2290, %v2457
      %v2459 = vpop.f32.mrf.mxu0
      %2460 = vmatprep.mubr.bf16.mxu0 0
      %2461 = vmatmul.mubr.bf16.gmra.mxu0 %v2341
      %v2462 = vpop.f32.mrf.mxu0
      %v2463 = vadd.f32 %v2290, %v2462
      %v2464 = vpop.f32.mrf.mxu0
      %v2465 = vpop.f32.mrf.mxu0
      %v2466 = vadd.f32 %v2290, %v2465
      %v2467 = vpop.f32.mrf.mxu0
      %2468 = vmatprep.mubr.bf16.mxu0 0
      %2469 = vmatmul.mubr.bf16.gmra.mxu0 %v2344
      %v2470 = vpop.f32.mrf.mxu0
      %v2471 = vadd.f32 %v2290, %v2470
      %v2472 = vpop.f32.mrf.mxu0
      %v2473 = vpop.f32.mrf.mxu0
      %v2474 = vadd.f32 %v2290, %v2473
      %v2475 = vpop.f32.mrf.mxu0
      %2476 = vmatprep.mubr.bf16.mxu0 0
      %2477 = vmatmul.mubr.bf16.gmra.mxu0 %v2347
      %v2478 = vpop.f32.mrf.mxu0
      %v2479 = vadd.f32 %v2290, %v2478
      %v2480 = vpop.f32.mrf.mxu0
      %v2481 = vpop.f32.mrf.mxu0
      %v2482 = vadd.f32 %v2290, %v2481
      %v2483 = vpop.f32.mrf.mxu0
      %2484 = vmatprep.mubr.bf16.mxu0 0
      %2485 = vmatmul.mubr.bf16.gmra.mxu0 %v2350
      %v2486 = vpop.f32.mrf.mxu0
      %v2487 = vadd.f32 %v2290, %v2486
      %v2488 = vpop.f32.mrf.mxu0
      %v2489 = vpop.f32.mrf.mxu0
      %v2490 = vadd.f32 %v2290, %v2489
      %v2491 = vpop.f32.mrf.mxu0
      %2492 = vmatprep.mubr.bf16.mxu0 0
      %2493 = vmatmul.mubr.bf16.gmra.mxu0 %v2353
      %v2494 = vpop.f32.mrf.mxu0
      %v2495 = vadd.f32 %v2290, %v2494
      %v2496 = vpop.f32.mrf.mxu0
      %v2497 = vpop.f32.mrf.mxu0
      %v2498 = vadd.f32 %v2290, %v2497
      %v2499 = vpop.f32.mrf.mxu0
      %2500 = vmatprep.mubr.bf16.mxu0 0
      %2501 = vmatmul.mubr.bf16.gmra.mxu0 %v2356
      %v2502 = vpop.f32.mrf.mxu0
      %v2503 = vadd.f32 %v2290, %v2502
      %v2504 = vpop.f32.mrf.mxu0
      %v2505 = vpop.f32.mrf.mxu0
      %v2506 = vadd.f32 %v2290, %v2505
      %v2507 = vpop.f32.mrf.mxu0
      %2508 = vmatprep.mubr.bf16.mxu0 0
      %2509 = vmatmul.mubr.bf16.gmra.mxu0 %v2359
      %v2510 = vpop.f32.mrf.mxu0
      %v2511 = vadd.f32 %v2290, %v2510
      %v2512 = vpop.f32.mrf.mxu0
      %v2513 = vpop.f32.mrf.mxu0
      %v2514 = vadd.f32 %v2290, %v2513
      %v2515 = vpop.f32.mrf.mxu0
      %2516 = vmatprep.mubr.bf16.mxu0 0
      %2517 = vmatmul.mubr.bf16.gmra.mxu0 %v2362
      %v2518 = vpop.f32.mrf.mxu0
      %v2519 = vadd.f32 %v2290, %v2518
      %v2520 = vpop.f32.mrf.mxu0
      %v2521 = vpop.f32.mrf.mxu0
      %v2522 = vadd.f32 %v2290, %v2521
      %v2523 = vpop.f32.mrf.mxu0
      %2524 = vdwg.mxu0
      %2525 = vst.msk [vmem:[%s508] sm:$0xff] %vm657, %v2399
      %2526 = vst.msk [vmem:[%s508 + $0x8] sm:$0xff] %vm657, %v2402
      %2527 = vst.msk [vmem:[%s508 + $0x10] sm:$0xff] %vm657, %v2407
      %2528 = vst.msk [vmem:[%s508 + $0x18] sm:$0xff] %vm657, %v2410
      %2529 = vst.msk [vmem:[%s508 + $0x20] sm:$0xff] %vm657, %v2415
      %2530 = vst.msk [vmem:[%s508 + $0x28] sm:$0xff] %vm657, %v2418
      %2531 = vst.msk [vmem:[%s508 + $0x30] sm:$0xff] %vm657, %v2423
      %2532 = vst.msk [vmem:[%s508 + $0x38] sm:$0xff] %vm657, %v2426
      %2533 = vst.msk [vmem:[%s508 + $0x40] sm:$0xff] %vm657, %v2431
      %2534 = vst.msk [vmem:[%s508 + $0x48] sm:$0xff] %vm657, %v2434
      %2535 = vst.msk [vmem:[%s508 + $0x50] sm:$0xff] %vm657, %v2439
      %2536 = vst.msk [vmem:[%s508 + $0x58] sm:$0xff] %vm657, %v2442
      %2537 = vst.msk [vmem:[%s508 + $0x60] sm:$0xff] %vm657, %v2447
      %2538 = vst.msk [vmem:[%s508 + $0x68] sm:$0xff] %vm657, %v2450
      %2539 = vst.msk [vmem:[%s508 + $0x70] sm:$0xff] %vm657, %v2455
      %2540 = vst.msk [vmem:[%s508 + $0x78] sm:$0xff] %vm657, %v2458
      %2541 = vst.msk [vmem:[%s508 + $0x80] sm:$0xff] %vm657, %v2463
      %2542 = vst.msk [vmem:[%s508 + $0x88] sm:$0xff] %vm657, %v2466
      %2543 = vst.msk [vmem:[%s508 + $0x90] sm:$0xff] %vm657, %v2471
      %2544 = vst.msk [vmem:[%s508 + $0x98] sm:$0xff] %vm657, %v2474
      %2545 = vst.msk [vmem:[%s508 + $0xa0] sm:$0xff] %vm657, %v2479
      %2546 = vst.msk [vmem:[%s508 + $0xa8] sm:$0xff] %vm657, %v2482
      %2547 = vst.msk [vmem:[%s508 + $0xb0] sm:$0xff] %vm657, %v2487
      %2548 = vst.msk [vmem:[%s508 + $0xb8] sm:$0xff] %vm657, %v2490
      %2549 = vst.msk [vmem:[%s508 + $0xc0] sm:$0xff] %vm657, %v2495
      %2550 = vst.msk [vmem:[%s508 + $0xc8] sm:$0xff] %vm657, %v2498
      %2551 = vst.msk [vmem:[%s508 + $0xd0] sm:$0xff] %vm657, %v2503
      %2552 = vst.msk [vmem:[%s508 + $0xd8] sm:$0xff] %vm657, %v2506
      %2553 = vst.msk [vmem:[%s508 + $0xe0] sm:$0xff] %vm657, %v2511
      %2554 = vst.msk [vmem:[%s508 + $0xe8] sm:$0xff] %vm657, %v2514
      %2555 = vst.msk [vmem:[%s508 + $0xf0] sm:$0xff] %vm657, %v2519
      %2556 = vst.msk [vmem:[%s508 + $0xf8] sm:$0xff] %vm657, %v2522
      %s2557 = smul.u32 32, %s24
      %p2558 = scmp.lt.s32.totalorder %s2557, 127
      %s2559 = scalar_select %p2558, %s2557, 127
      %s2560 = smul.addr %s2559, 8
      %s2561 = scalar_lea.vmem %s13, %s2560
      // Predicated region
      $region73: #{tpu_custom_call.1} parent=71 // pred_check
        %p2562 = pneg %p335
      $region74: #{tpu_custom_call.1} parent=71 // pred_check_branch
        %2564 = sbr.rel (%p2562) target = $region76
      $region75: #{tpu_custom_call.1} parent=71 // pred_region
        %s2565 = smul.u32 32, %s24
      $region76: #{tpu_custom_call.1} parent=71 // pred_fallthru
        _
    $region72: #{tpu_custom_call.1} parent=5 // pred_fallthru
      _
    %p2566 = scmp.le.s32.totalorder 2, %s19
    // Predicated region
    $region77: #{tpu_custom_call.1} parent=5 // pred_check
      %p2567 = pneg %p2566
    $region78: #{tpu_custom_call.1} parent=5 // pred_check_branch
      %2569 = sbr.rel (%p2567) target = $region80
    $region79: #{tpu_custom_call.1} parent=5 // pred_region
      %s2570 = ssub.s32 %s19, 2
      // Predicated region
      $region81: #{tpu_custom_call.1} parent=79 // pred_check
        %p2571 = pneg %p341
      $region82: #{tpu_custom_call.1} parent=79 // pred_check_branch
        %2573 = sbr.rel (%p2571) target = $region84
      $region83: #{tpu_custom_call.1} parent=79 // pred_region
        %s2574 = smul.u32 32, %s25
        %p2575 = scmp.lt.s32.totalorder %s2574, 127
        %s2576 = scalar_select %p2575, %s2574, 127
        %s2577 = smul.addr %s2576, 8
        %s2578 = scalar_lea.vmem %s13, %s2577
      $region84: #{tpu_custom_call.1} parent=79 // pred_fallthru
        _
    $region80: #{tpu_custom_call.1} parent=5 // pred_fallthru
      _
  $region6: #{tpu_custom_call.1} parent=0 // loop_footer
    %s23 = sadd.s32 1, %s19
  $region7: #{tpu_custom_call.1} parent=0 // loop_footer_branch
    %18 = sbr.rel target = $region3
  $region8: #{tpu_custom_call.1} parent=0 // loop_exit
    _

</llo_original>
